<compile_context>
chip_gen: v7x
topology: tpu7x:2x2x1
jax: 0.10.0
libtpu: 0.0.40
codegen_flags: <defaults>
</compile_context>

<pallas_src>
import jax
import jax.numpy as jnp
from jax.experimental import pallas as pl
from jax.experimental.pallas import tpu as pltpu


_VMEM_BUDGET_BYTES = 48 * 2**20     # fits v7x (64 MiB/TC) with headroom
_MAX_ROW_TILE = 512                 # 256-512 per review; multiple of 8 sublanes
_SINGLE_BUFFER_WEIGHTS_OK = None    # resolved at first pallas_call


def _round_up(x, m):
    return (x + m - 1) // m * m


# ----------------------------------------------------------------------------
# Pallas kernel: fused embedding gather + per-token MLP + mask-out
#   y = relu(emb[ids] @ W1 + b1) @ W2 + b2 ; y *= mask
# ----------------------------------------------------------------------------
def encoder_mlp_kernel(ids_ref, m_ref, emb_ref, w1_ref, b1_ref, w2_ref,
                       b2_ref, o_ref):
    t = ids_ref.shape[0]
    vp = emb_ref.shape[0]
    # Embedding gather as a one-hot MXU matmul (exact for one-hot operands).
    onehot = (ids_ref[...] ==
              jax.lax.broadcasted_iota(jnp.int32, (t, vp), 1)
              ).astype(jnp.bfloat16)
    x = jnp.dot(onehot, emb_ref[...],
                preferred_element_type=jnp.float32).astype(jnp.bfloat16)
    # 2-layer MLP: bf16 MXU inputs, f32 accumulation, f32 elementwise (v5e VPU).
    h = jnp.dot(x, w1_ref[...], preferred_element_type=jnp.float32) + b1_ref[...]
    h = jnp.maximum(h, 0.0)
    y = jnp.dot(h.astype(jnp.bfloat16), w2_ref[...],
                preferred_element_type=jnp.float32) + b2_ref[...]
    # Mask padded tokens on the f32 accumulator; downcast only at the store.
    o_ref[...] = (y * m_ref[...]).astype(o_ref.dtype)


def _choose_row_tile(num_rows, v_pad, d_model, d_ff):
    """Largest row tile (multiple of 8, <= _MAX_ROW_TILE) that fits the VMEM budget."""
    # Worst case: weights double-buffered (bf16) + f32 biases.
    weight_bytes = 2 * ((v_pad * d_model + 2 * d_model * d_ff) * 2
                        + (d_ff + d_model) * 4)
    rt = min(_MAX_ROW_TILE, _round_up(num_rows, 8))
    while rt > 8:
        io_bytes = 2 * rt * (4 + 4 + 2 * d_model)                  # ids/mask/out, 2 bufs
        live_bytes = rt * (2 * v_pad + 2 * d_model                 # onehot + x (bf16)
                           + 4 * d_ff + 4 * d_model)               # h + y (f32)
        if weight_bytes + io_bytes + live_bytes <= _VMEM_BUDGET_BYTES:
            break
        rt = max(8, _round_up(rt // 2, 8))
    return rt


def encoder_forward_pallas(token_ids, attention_mask, embedding, w1, b1, w2, b2):
    """token_ids/attention_mask: (R,), embedding: (V, D) bf16 -> (R, D) bf16."""
    global _SINGLE_BUFFER_WEIGHTS_OK
    (R,) = token_ids.shape
    V, D = embedding.shape
    F = w1.shape[1]

    # Lane-dense invariant: output / intermediate last dims multiple of 128.
    if D % 128 != 0 or F % 128 != 0:
        raise ValueError(
            f"d_model and d_ff must be multiples of 128 (got {D}, {F})")

    v_pad = _round_up(V, 128)
    if v_pad != V:
        embedding = jnp.pad(embedding, ((0, v_pad - V), (0, 0)))

    row_tile = _choose_row_tile(R, v_pad, D, F)
    r_pad = _round_up(R, row_tile)
    ids2d = jnp.pad(token_ids.astype(jnp.int32),
                    (0, r_pad - R)).reshape(r_pad, 1)
    mask2d = jnp.pad(attention_mask.astype(jnp.float32),
                     (0, r_pad - R)).reshape(r_pad, 1)

    weight_bytes = (v_pad * D + 2 * D * F) * 2 + (F + D) * 4
    need_bytes = (2 * weight_bytes
                  + 2 * row_tile * (4 + 4 + 2 * D)
                  + row_tile * (2 * v_pad + 4 * F + 6 * D))
    vmem_limit = int(min(100 * 2**20, max(32 * 2**20, 2 * need_bytes)))

    flops = 2 * r_pad * (v_pad * D + D * F + F * D)
    bytes_accessed = weight_bytes + r_pad * (4 + 4 + 2 * D)

    def run(single_buffer_weights):
        # Constant-index weight blocks: double-buffering them is pure VMEM waste.
        wkw = ({"pipeline_mode": pl.Buffered(1)}
               if single_buffer_weights else {})
        grid_spec = pltpu.PrefetchScalarGridSpec(
            num_scalar_prefetch=0,
            grid=(r_pad // row_tile,),
            in_specs=[
                pl.BlockSpec((row_tile, 1), lambda i: (i, 0)),          # ids
                pl.BlockSpec((row_tile, 1), lambda i: (i, 0)),          # mask
                pl.BlockSpec((v_pad, D), lambda i: (0, 0), **wkw),      # emb
                pl.BlockSpec((D, F), lambda i: (0, 0), **wkw),          # W1
                pl.BlockSpec((1, F), lambda i: (0, 0), **wkw),          # b1
                pl.BlockSpec((F, D), lambda i: (0, 0), **wkw),          # W2
                pl.BlockSpec((1, D), lambda i: (0, 0), **wkw),          # b2
            ],
            out_specs=pl.BlockSpec((row_tile, D), lambda i: (i, 0)),
        )
        return pl.pallas_call(
            encoder_mlp_kernel,
            out_shape=jax.ShapeDtypeStruct((r_pad, D), jnp.bfloat16),
            grid_spec=grid_spec,
            compiler_params=pltpu.CompilerParams(
                dimension_semantics=("parallel",),
                vmem_limit_bytes=vmem_limit),
            cost_estimate=pl.CostEstimate(
                flops=flops, transcendentals=0,
                bytes_accessed=bytes_accessed),
        )(ids2d, mask2d, embedding, w1, b1, w2, b2)

    if _SINGLE_BUFFER_WEIGHTS_OK is None:
        try:
            out = jax.block_until_ready(run(True))
            _SINGLE_BUFFER_WEIGHTS_OK = True
        except Exception:
            # TODO(synk): this Pallas build rejected Buffered(1); use defaults.
            _SINGLE_BUFFER_WEIGHTS_OK = False
            out = run(False)
    else:
        out = run(_SINGLE_BUFFER_WEIGHTS_OK)
    return out[:R]


# ----------------------------------------------------------------------------
# Synthetic encoder (deterministic bf16 params) driving the Pallas kernel
# ----------------------------------------------------------------------------
class SyntheticEncoder:
    def __init__(self, key, vocab_size, d_model, d_ff):
        k_emb, k_w1, k_b1, k_w2, k_b2 = jax.random.split(key, 5)
        self.d_model = d_model
        self.embedding = jax.random.normal(
            k_emb, (vocab_size, d_model), jnp.float32).astype(jnp.bfloat16)
        self.w1 = (jax.random.normal(k_w1, (d_model, d_ff), jnp.float32)
                   * d_model ** -0.5).astype(jnp.bfloat16)
        self.b1 = jax.random.normal(k_b1, (1, d_ff), jnp.float32) * 0.1
        self.w2 = (jax.random.normal(k_w2, (d_ff, d_model), jnp.float32)
                   * d_ff ** -0.5).astype(jnp.bfloat16)
        self.b2 = jax.random.normal(k_b2, (1, d_model), jnp.float32) * 0.1

    def __call__(self, input_ids, attention_mask, **kwargs):
        # input_ids / attention_mask: (bsz*n_ctx, fuse_length)
        n_seq, fuse_length = input_ids.shape
        y = encoder_forward_pallas(
            input_ids.reshape(-1), attention_mask.reshape(-1),
            self.embedding, self.w1, self.b1, self.w2, self.b2)
        last_hidden = y.reshape(n_seq, fuse_length, self.d_model)
        return (last_hidden,)


# ----------------------------------------------------------------------------
# FiDEncoderWrapper (JAX port of the PyTorch forward semantics)
# NOTE: keeps mutable host-side state across calls (mirrors the PyTorch
# module); do not wrap .forward in jax.jit.
# ----------------------------------------------------------------------------
class FiDEncoderWrapper:
    def __init__(self, encoder, n_tasks=-1, d_model=512, top_k_candidates=-1,
                 use_aux_loss=False):
        self.encoder = encoder
        self.use_aux_loss = use_aux_loss
        self.n_tasks = n_tasks
        self.top_k_candidates = top_k_candidates
        self.n_ctx = None
        self.preds = None
        self.aux_loss = None
        self.encoder_attention_mask = None
        self.encoder_attention_mask_used = True

    def forward(self, input_ids=None, attention_mask=None, return_dict=None,
                **kwargs):
        bsz, total_length = input_ids.shape
        fuse_length = total_length // self.n_ctx
        input_ids = input_ids.reshape(bsz * self.n_ctx, fuse_length)
        attention_mask = attention_mask.reshape(bsz * self.n_ctx, fuse_length)
        outputs = self.encoder(input_ids, attention_mask, **kwargs)

        # use_aux_loss / top-k path intentionally not taken (defaults).
        last_hidden_states = outputs[0].reshape(
            bsz, self.n_ctx * fuse_length, -1)
        attention_mask = attention_mask.reshape(
            bsz, self.n_ctx * fuse_length)
        if self.encoder_attention_mask_used:
            self.encoder_attention_mask = attention_mask
            self.encoder_attention_mask_used = False
        else:
            self.encoder_attention_mask = jnp.concatenate(
                (self.encoder_attention_mask, attention_mask), axis=0)

        outputs = (last_hidden_states,) + outputs[1:]
        return tuple(v for v in outputs if v is not None)

    def get_attention_mask_for_decoder(self):
        if self.encoder_attention_mask is None:
            raise ValueError("encoder_attention_mask is not set")
        self.encoder_attention_mask_used = True
        return self.encoder_attention_mask


# ----------------------------------------------------------------------------
if __name__ == "__main__":
    key = jax.random.PRNGKey(0)
    k_enc, k_ids, k_mask = jax.random.split(key, 3)

    bsz, n_ctx, fuse_length = 2, 4, 8
    total_length = n_ctx * fuse_length            # 32
    d_model, d_ff, vocab = 128, 256, 100          # lane-dense D / F

    encoder = SyntheticEncoder(k_enc, vocab, d_model, d_ff)
    wrapper = FiDEncoderWrapper(encoder, d_model=d_model)
    wrapper.n_ctx = n_ctx

    input_ids = jax.random.randint(k_ids, (bsz, total_length), 0, vocab,
                                   dtype=jnp.int32)
    # mask out the tail of every fused passage to exercise the mask path
    pos = jnp.arange(total_length) % fuse_length
    attention_mask = jnp.broadcast_to(
        (pos < fuse_length - 2).astype(jnp.int32), (bsz, total_length))

    outputs = wrapper.forward(input_ids=input_ids,
                              attention_mask=attention_mask)
    last_hidden = jax.block_until_ready(outputs[0])
    dec_mask = jax.block_until_ready(wrapper.get_attention_mask_for_decoder())

    assert last_hidden.shape == (bsz, n_ctx * fuse_length, d_model)
    assert dec_mask.shape == (bsz, n_ctx * fuse_length)

    # Correctness check vs a pure-JAX reference of the encoder hot path
    # (same bf16 weights / hidden cast; f32 accumulation at HIGHEST precision).
    embf = encoder.embedding.astype(jnp.float32)
    w1f = encoder.w1.astype(jnp.float32)
    w2f = encoder.w2.astype(jnp.float32)
    x = jnp.take(embf, input_ids.reshape(-1), axis=0)
    h = jnp.maximum(
        jnp.dot(x, w1f, precision=jax.lax.Precision.HIGHEST) + encoder.b1, 0.0)
    h = h.astype(jnp.bfloat16).astype(jnp.float32)
    y = jnp.dot(h, w2f, precision=jax.lax.Precision.HIGHEST) + encoder.b2
    ref = y * attention_mask.reshape(-1, 1).astype(jnp.float32)
    ref = ref.reshape(bsz, n_ctx * fuse_length, d_model)

    max_err = float(jnp.max(jnp.abs(last_hidden.astype(jnp.float32) - ref)))
    assert max_err < 5e-2, f"max abs error {max_err}"

    print("KERNEL_OK")
</pallas_src>

<mosaic_0001>
module attributes {stable_mosaic.version = 11 : i64} {
  func.func @encoder_mlp_kernel(%arg0: i32, %arg1: memref<64x1xi32, #tpu.memory_space<vmem>>, %arg2: memref<64x1xf32, #tpu.memory_space<vmem>>, %arg3: memref<128x128xbf16, #tpu.memory_space<vmem>>, %arg4: memref<128x256xbf16, #tpu.memory_space<vmem>>, %arg5: memref<1x256xf32, #tpu.memory_space<vmem>>, %arg6: memref<256x128xbf16, #tpu.memory_space<vmem>>, %arg7: memref<1x128xf32, #tpu.memory_space<vmem>>, %arg8: memref<64x128xbf16, #tpu.memory_space<vmem>>) attributes {dimension_semantics = [#tpu.dimension_semantics<parallel>], iteration_bounds = array<i64: 1>, scalar_prefetch = 0 : i64, scratch_operands = 0 : i64, tpu.core_type = #tpu.core_type<tc>, window_params = [{transform_indices = @transform_0, window_bounds = array<i64: 64, 1>}, {transform_indices = @transform_1, window_bounds = array<i64: 64, 1>}, {pipeline_mode = #tpu.pipeline_mode<synchronous>, transform_indices = @transform_2, window_bounds = array<i64: 128, 128>}, {pipeline_mode = #tpu.pipeline_mode<synchronous>, transform_indices = @transform_3, window_bounds = array<i64: 128, 256>}, {pipeline_mode = #tpu.pipeline_mode<synchronous>, transform_indices = @transform_4, window_bounds = array<i64: 1, 256>}, {pipeline_mode = #tpu.pipeline_mode<synchronous>, transform_indices = @transform_5, window_bounds = array<i64: 256, 128>}, {pipeline_mode = #tpu.pipeline_mode<synchronous>, transform_indices = @transform_6, window_bounds = array<i64: 1, 128>}, {transform_indices = @transform_7, window_bounds = array<i64: 64, 128>}]} {
    %c0 = arith.constant 0 : index
    %c0_0 = arith.constant 0 : index
    %0 = vector.load %arg1[%c0, %c0_0] : memref<64x1xi32, #tpu.memory_space<vmem>>, vector<64x1xi32>
    %1 = tpu.iota {dimensions = array<i32: 1>} : vector<64x128xi32>
    %2 = vector.broadcast %0 : vector<64x1xi32> to vector<64x128xi32>
    %3 = arith.cmpi eq, %2, %1 : vector<64x128xi32>
    %4 = arith.extui %3 : vector<64x128xi1> to vector<64x128xi32>
    %5 = arith.sitofp %4 : vector<64x128xi32> to vector<64x128xf32>
    %6 = arith.truncf %5 : vector<64x128xf32> to vector<64x128xbf16>
    %c0_1 = arith.constant 0 : index
    %c0_2 = arith.constant 0 : index
    %7 = vector.load %arg3[%c0_1, %c0_2] : memref<128x128xbf16, #tpu.memory_space<vmem>>, vector<128x128xbf16>
    %cst = arith.constant dense<0.000000e+00> : vector<64x128xf32>
    %8 = tpu.matmul %6, %7, %cst {dimension_numbers = #tpu.dot_dimension_numbers<[1], [0], [0], [1], [0, 0, 1, 1], [], []>} : vector<64x128xbf16>, vector<128x128xbf16>, vector<64x128xf32> -> vector<64x128xf32>
    %9 = arith.truncf %8 : vector<64x128xf32> to vector<64x128xbf16>
    %c0_3 = arith.constant 0 : index
    %c0_4 = arith.constant 0 : index
    %10 = vector.load %arg4[%c0_3, %c0_4] : memref<128x256xbf16, #tpu.memory_space<vmem>>, vector<128x256xbf16>
    %cst_5 = arith.constant dense<0.000000e+00> : vector<64x256xf32>
    %11 = tpu.matmul %9, %10, %cst_5 {dimension_numbers = #tpu.dot_dimension_numbers<[1], [0], [0], [1], [0, 0, 1, 1], [], []>} : vector<64x128xbf16>, vector<128x256xbf16>, vector<64x256xf32> -> vector<64x256xf32>
    %c0_6 = arith.constant 0 : index
    %c0_7 = arith.constant 0 : index
    %12 = vector.load %arg5[%c0_6, %c0_7] : memref<1x256xf32, #tpu.memory_space<vmem>>, vector<1x256xf32>
    %13 = vector.broadcast %12 : vector<1x256xf32> to vector<64x256xf32>
    %14 = arith.addf %11, %13 : vector<64x256xf32>
    %cst_8 = arith.constant 0.000000e+00 : f32
    %15 = vector.broadcast %cst_8 : f32 to vector<64x256xf32>
    %16 = arith.maximumf %14, %15 : vector<64x256xf32>
    %17 = arith.truncf %16 : vector<64x256xf32> to vector<64x256xbf16>
    %c0_9 = arith.constant 0 : index
    %c0_10 = arith.constant 0 : index
    %18 = vector.load %arg6[%c0_9, %c0_10] : memref<256x128xbf16, #tpu.memory_space<vmem>>, vector<256x128xbf16>
    %cst_11 = arith.constant dense<0.000000e+00> : vector<64x128xf32>
    %19 = tpu.matmul %17, %18, %cst_11 {dimension_numbers = #tpu.dot_dimension_numbers<[1], [0], [0], [1], [0, 0, 1, 1], [], []>} : vector<64x256xbf16>, vector<256x128xbf16>, vector<64x128xf32> -> vector<64x128xf32>
    %c0_12 = arith.constant 0 : index
    %c0_13 = arith.constant 0 : index
    %20 = vector.load %arg7[%c0_12, %c0_13] : memref<1x128xf32, #tpu.memory_space<vmem>>, vector<1x128xf32>
    %21 = vector.broadcast %20 : vector<1x128xf32> to vector<64x128xf32>
    %22 = arith.addf %19, %21 : vector<64x128xf32>
    %c0_14 = arith.constant 0 : index
    %c0_15 = arith.constant 0 : index
    %23 = vector.load %arg2[%c0_14, %c0_15] : memref<64x1xf32, #tpu.memory_space<vmem>>, vector<64x1xf32>
    %24 = vector.broadcast %23 : vector<64x1xf32> to vector<64x128xf32>
    %25 = arith.mulf %22, %24 : vector<64x128xf32>
    %26 = arith.truncf %25 : vector<64x128xf32> to vector<64x128xbf16>
    %c0_16 = arith.constant 0 : index
    %c0_17 = arith.constant 0 : index
    %27 = vector.load %arg8[%c0_16, %c0_17] : memref<64x128xbf16, #tpu.memory_space<vmem>>, vector<64x128xbf16>
    tpu.vector_store %arg8[%c0_16, %c0_17], %26 {strides = array<i32>} : memref<64x128xbf16, #tpu.memory_space<vmem>>, vector<64x128xbf16>,
    return
  }
  func.func @transform_0(%arg0: i32) -> (i32, i32) {
    %c0_i32 = arith.constant 0 : i32
    %c0_i32_0 = arith.constant 0 : i32
    return %arg0, %c0_i32 : i32, i32
  }
  func.func @transform_1(%arg0: i32) -> (i32, i32) {
    %c0_i32 = arith.constant 0 : i32
    %c0_i32_0 = arith.constant 0 : i32
    return %arg0, %c0_i32 : i32, i32
  }
  func.func @transform_2(%arg0: i32) -> (i32, i32) {
    %c0_i32 = arith.constant 0 : i32
    %c0_i32_0 = arith.constant 0 : i32
    %c0_i32_1 = arith.constant 0 : i32
    return %c0_i32, %c0_i32_0 : i32, i32
  }
  func.func @transform_3(%arg0: i32) -> (i32, i32) {
    %c0_i32 = arith.constant 0 : i32
    %c0_i32_0 = arith.constant 0 : i32
    %c0_i32_1 = arith.constant 0 : i32
    return %c0_i32, %c0_i32_0 : i32, i32
  }
  func.func @transform_4(%arg0: i32) -> (i32, i32) {
    %c0_i32 = arith.constant 0 : i32
    %c0_i32_0 = arith.constant 0 : i32
    %c0_i32_1 = arith.constant 0 : i32
    return %c0_i32, %c0_i32_0 : i32, i32
  }
  func.func @transform_5(%arg0: i32) -> (i32, i32) {
    %c0_i32 = arith.constant 0 : i32
    %c0_i32_0 = arith.constant 0 : i32
    %c0_i32_1 = arith.constant 0 : i32
    return %c0_i32, %c0_i32_0 : i32, i32
  }
  func.func @transform_6(%arg0: i32) -> (i32, i32) {
    %c0_i32 = arith.constant 0 : i32
    %c0_i32_0 = arith.constant 0 : i32
    %c0_i32_1 = arith.constant 0 : i32
    return %c0_i32, %c0_i32_0 : i32, i32
  }
  func.func @transform_7(%arg0: i32) -> (i32, i32) {
    %c0_i32 = arith.constant 0 : i32
    %c0_i32_0 = arith.constant 0 : i32
    return %arg0, %c0_i32 : i32, i32
  }
}

module attributes {stable_mosaic.version = 11 : i64} {
  func.func @encoder_mlp_kernel(%arg0: i32, %arg1: memref<64x1xi32, #tpu.memory_space<vmem>>, %arg2: memref<64x1xf32, #tpu.memory_space<vmem>>, %arg3: memref<128x128xbf16, #tpu.memory_space<vmem>>, %arg4: memref<128x256xbf16, #tpu.memory_space<vmem>>, %arg5: memref<1x256xf32, #tpu.memory_space<vmem>>, %arg6: memref<256x128xbf16, #tpu.memory_space<vmem>>, %arg7: memref<1x128xf32, #tpu.memory_space<vmem>>, %arg8: memref<64x128xbf16, #tpu.memory_space<vmem>>) attributes {dimension_semantics = [#tpu.dimension_semantics<parallel>], iteration_bounds = array<i64: 1>, scalar_prefetch = 0 : i64, scratch_operands = 0 : i64, tpu.core_type = #tpu.core_type<tc>, window_params = [{transform_indices = @transform_0, window_bounds = array<i64: 64, 1>}, {transform_indices = @transform_1, window_bounds = array<i64: 64, 1>}, {pipeline_mode = #tpu.pipeline_mode<synchronous>, transform_indices = @transform_2, window_bounds = array<i64: 128, 128>}, {pipeline_mode = #tpu.pipeline_mode<synchronous>, transform_indices = @transform_3, window_bounds = array<i64: 128, 256>}, {pipeline_mode = #tpu.pipeline_mode<synchronous>, transform_indices = @transform_4, window_bounds = array<i64: 1, 256>}, {pipeline_mode = #tpu.pipeline_mode<synchronous>, transform_indices = @transform_5, window_bounds = array<i64: 256, 128>}, {pipeline_mode = #tpu.pipeline_mode<synchronous>, transform_indices = @transform_6, window_bounds = array<i64: 1, 128>}, {transform_indices = @transform_7, window_bounds = array<i64: 64, 128>}]} {
    %c0 = arith.constant 0 : index
    %c0_0 = arith.constant 0 : index
    %0 = vector.load %arg1[%c0, %c0_0] : memref<64x1xi32, #tpu.memory_space<vmem>>, vector<64x1xi32>
    %1 = tpu.iota {dimensions = array<i32: 1>} : vector<64x128xi32>
    %2 = vector.broadcast %0 : vector<64x1xi32> to vector<64x128xi32>
    %3 = arith.cmpi eq, %2, %1 : vector<64x128xi32>
    %4 = arith.extui %3 : vector<64x128xi1> to vector<64x128xi32>
    %5 = arith.sitofp %4 : vector<64x128xi32> to vector<64x128xf32>
    %6 = arith.truncf %5 : vector<64x128xf32> to vector<64x128xbf16>
    %c0_1 = arith.constant 0 : index
    %c0_2 = arith.constant 0 : index
    %7 = vector.load %arg3[%c0_1, %c0_2] : memref<128x128xbf16, #tpu.memory_space<vmem>>, vector<128x128xbf16>
    %cst = arith.constant dense<0.000000e+00> : vector<64x128xf32>
    %8 = tpu.matmul %6, %7, %cst {dimension_numbers = #tpu.dot_dimension_numbers<[1], [0], [0], [1], [0, 0, 1, 1], [], []>} : vector<64x128xbf16>, vector<128x128xbf16>, vector<64x128xf32> -> vector<64x128xf32>
    %9 = arith.truncf %8 : vector<64x128xf32> to vector<64x128xbf16>
    %c0_3 = arith.constant 0 : index
    %c0_4 = arith.constant 0 : index
    %10 = vector.load %arg4[%c0_3, %c0_4] : memref<128x256xbf16, #tpu.memory_space<vmem>>, vector<128x256xbf16>
    %cst_5 = arith.constant dense<0.000000e+00> : vector<64x256xf32>
    %11 = tpu.matmul %9, %10, %cst_5 {dimension_numbers = #tpu.dot_dimension_numbers<[1], [0], [0], [1], [0, 0, 1, 1], [], []>} : vector<64x128xbf16>, vector<128x256xbf16>, vector<64x256xf32> -> vector<64x256xf32>
    %c0_6 = arith.constant 0 : index
    %c0_7 = arith.constant 0 : index
    %12 = vector.load %arg5[%c0_6, %c0_7] : memref<1x256xf32, #tpu.memory_space<vmem>>, vector<1x256xf32>
    %13 = vector.broadcast %12 : vector<1x256xf32> to vector<64x256xf32>
    %14 = arith.addf %11, %13 : vector<64x256xf32>
    %cst_8 = arith.constant 0.000000e+00 : f32
    %15 = vector.broadcast %cst_8 : f32 to vector<64x256xf32>
    %16 = arith.maximumf %14, %15 : vector<64x256xf32>
    %17 = arith.truncf %16 : vector<64x256xf32> to vector<64x256xbf16>
    %c0_9 = arith.constant 0 : index
    %c0_10 = arith.constant 0 : index
    %18 = vector.load %arg6[%c0_9, %c0_10] : memref<256x128xbf16, #tpu.memory_space<vmem>>, vector<256x128xbf16>
    %cst_11 = arith.constant dense<0.000000e+00> : vector<64x128xf32>
    %19 = tpu.matmul %17, %18, %cst_11 {dimension_numbers = #tpu.dot_dimension_numbers<[1], [0], [0], [1], [0, 0, 1, 1], [], []>} : vector<64x256xbf16>, vector<256x128xbf16>, vector<64x128xf32> -> vector<64x128xf32>
    %c0_12 = arith.constant 0 : index
    %c0_13 = arith.constant 0 : index
    %20 = vector.load %arg7[%c0_12, %c0_13] : memref<1x128xf32, #tpu.memory_space<vmem>>, vector<1x128xf32>
    %21 = vector.broadcast %20 : vector<1x128xf32> to vector<64x128xf32>
    %22 = arith.addf %19, %21 : vector<64x128xf32>
    %c0_14 = arith.constant 0 : index
    %c0_15 = arith.constant 0 : index
    %23 = vector.load %arg2[%c0_14, %c0_15] : memref<64x1xf32, #tpu.memory_space<vmem>>, vector<64x1xf32>
    %24 = vector.broadcast %23 : vector<64x1xf32> to vector<64x128xf32>
    %25 = arith.mulf %22, %24 : vector<64x128xf32>
    %26 = arith.truncf %25 : vector<64x128xf32> to vector<64x128xbf16>
    %c0_16 = arith.constant 0 : index
    %c0_17 = arith.constant 0 : index
    %27 = vector.load %arg8[%c0_16, %c0_17] : memref<64x128xbf16, #tpu.memory_space<vmem>>, vector<64x128xbf16>
    tpu.vector_store %arg8[%c0_16, %c0_17], %26 {strides = array<i32>} : memref<64x128xbf16, #tpu.memory_space<vmem>>, vector<64x128xbf16>,
    return
  }
  func.func @transform_0(%arg0: i32) -> (i32, i32) {
    %c0_i32 = arith.constant 0 : i32
    %c0_i32_0 = arith.constant 0 : i32
    return %arg0, %c0_i32 : i32, i32
  }
  func.func @transform_1(%arg0: i32) -> (i32, i32) {
    %c0_i32 = arith.constant 0 : i32
    %c0_i32_0 = arith.constant 0 : i32
    return %arg0, %c0_i32 : i32, i32
  }
  func.func @transform_2(%arg0: i32) -> (i32, i32) {
    %c0_i32 = arith.constant 0 : i32
    %c0_i32_0 = arith.constant 0 : i32
    %c0_i32_1 = arith.constant 0 : i32
    return %c0_i32, %c0_i32_0 : i32, i32
  }
  func.func @transform_3(%arg0: i32) -> (i32, i32) {
    %c0_i32 = arith.constant 0 : i32
    %c0_i32_0 = arith.constant 0 : i32
    %c0_i32_1 = arith.constant 0 : i32
    return %c0_i32, %c0_i32_0 : i32, i32
  }
  func.func @transform_4(%arg0: i32) -> (i32, i32) {
    %c0_i32 = arith.constant 0 : i32
    %c0_i32_0 = arith.constant 0 : i32
    %c0_i32_1 = arith.constant 0 : i32
    return %c0_i32, %c0_i32_0 : i32, i32
  }
  func.func @transform_5(%arg0: i32) -> (i32, i32) {
    %c0_i32 = arith.constant 0 : i32
    %c0_i32_0 = arith.constant 0 : i32
    %c0_i32_1 = arith.constant 0 : i32
    return %c0_i32, %c0_i32_0 : i32, i32
  }
  func.func @transform_6(%arg0: i32) -> (i32, i32) {
    %c0_i32 = arith.constant 0 : i32
    %c0_i32_0 = arith.constant 0 : i32
    %c0_i32_1 = arith.constant 0 : i32
    return %c0_i32, %c0_i32_0 : i32, i32
  }
  func.func @transform_7(%arg0: i32) -> (i32, i32) {
    %c0_i32 = arith.constant 0 : i32
    %c0_i32_0 = arith.constant 0 : i32
    return %arg0, %c0_i32 : i32, i32
  }
}

</mosaic_0001>

<llo_original>
// kernel: tpu_custom_call.1
$region0: #{tpu_custom_call.1}
  #allocation0 [shape = 'u32[]', space=smem, size = 0x4, offset = 0x4, fixed_abs, tag = 'smem constant byte address 0x4 - core index']
  #allocation1 [shape = 'u32[144,128]{1,0:T(1,128)}', space=vmem, size = 0x12000, scoped, tag = 'internal scratch']
  %s0 = inlined_call_operand.vmem [shape: s32[64,1], index: 0, kind: input, shape index: {}]
  %s1 = inlined_call_operand.vmem [shape: f32[64,1], index: 1, kind: input, shape index: {}]
  %s2 = inlined_call_operand.hbm [shape: bf16[128,128], index: 2, kind: input, shape index: {}]
  %s3 = inlined_call_operand.vmem [shape: bf16[128,256], index: 3, kind: input, shape index: {}]
  %s4 = inlined_call_operand.vmem [shape: f32[1,256], index: 4, kind: input, shape index: {}]
  %s5 = inlined_call_operand.hbm [shape: bf16[256,128], index: 5, kind: input, shape index: {}]
  %s6 = inlined_call_operand.vmem [shape: f32[1,128], index: 6, kind: input, shape index: {}]
  %s7 = inlined_call_operand.hbm [shape: bf16[64,128], index: 7, kind: output, shape index: {}]
  %s8 = sld [smem:[#allocation0]]
  $region46: #{tpu_custom_call.1} parent=0
    _
  %s10 = ssub.s32 1, %s8
  %s11 = scalar_select 0, %s10, %s8
  $region1: #{tpu_custom_call.1} parent=0
    #allocation2 [shape = 'u8[32768]{0}', space=vmem, size = 0x8000, scoped, tag = 'input window, operand 2, single buffered']
    #allocation3 [shape = 's32[1]{0}', space=sflag, size = 0x4, scoped, tag = 'scoped memory for tpu_custom_call.1']
    #allocation4 [shape = 's32[1]{0}', space=sflag, size = 0x4, scoped, tag = 'scoped memory for tpu_custom_call.1']
    #allocation5 [shape = 'u8[65536]{0}', space=vmem, size = 0x10000, scoped, tag = 'input window, operand 5, single buffered']
    #allocation6 [shape = 's32[1]{0}', space=sflag, size = 0x4, scoped, tag = 'scoped memory for tpu_custom_call.1']
    #allocation7 [shape = 'u8[16384]{0}', space=vmem, size = 0x4000, scoped, tag = 'output window, operand 0, single buffered']
    %12 = vsyncpa [#allocation3], 0
    %13 = vsyncpa [#allocation6], 0
    %14 = vsyncpa [#allocation4], 0
    // Predicated region
    $region2: #{tpu_custom_call.1} parent=1 // pred_check
      _
    $region3: #{tpu_custom_call.1} parent=1 // pred_check_branch
      %16 = sbr.rel (0) target = $region5
    $region4: #{tpu_custom_call.1} parent=1 // pred_region
      _
    $region5: #{tpu_custom_call.1} parent=1 // pred_fallthru
      _
    // Predicated region
    $region6: #{tpu_custom_call.1} parent=1 // pred_check
      _
    $region7: #{tpu_custom_call.1} parent=1 // pred_check_branch
      %18 = sbr.rel (0) target = $region9
    $region8: #{tpu_custom_call.1} parent=1 // pred_region
      _
    $region9: #{tpu_custom_call.1} parent=1 // pred_fallthru
      _
    // Predicated region
    $region10: #{tpu_custom_call.1} parent=1 // pred_check
      _
    $region11: #{tpu_custom_call.1} parent=1 // pred_check_branch
      %20 = sbr.rel (0) target = $region13
    $region12: #{tpu_custom_call.1} parent=1 // pred_region
      %s22 = ssub.s32 1024, 1024
      %23 = vsyncadd [#allocation3], %s22
      %s24 = sshll.u32 [#allocation2], 4
      %s25 = int_to_ptr.vmem [resolvable:$true] %s24
      %30 = dma.hbm_to_vmem [thread:$0]  %s2, 1024, %s25, [#allocation3], 64, 64, 4
    $region13: #{tpu_custom_call.1} parent=1 // pred_fallthru
      _
    // Predicated region
    $region14: #{tpu_custom_call.1} parent=1 // pred_check
      _
    $region15: #{tpu_custom_call.1} parent=1 // pred_check_branch
      %32 = sbr.rel (0) target = $region17
    $region16: #{tpu_custom_call.1} parent=1 // pred_region
      _
    $region17: #{tpu_custom_call.1} parent=1 // pred_fallthru
      _
    // Predicated region
    $region18: #{tpu_custom_call.1} parent=1 // pred_check
      _
    $region19: #{tpu_custom_call.1} parent=1 // pred_check_branch
      %34 = sbr.rel (0) target = $region21
    $region20: #{tpu_custom_call.1} parent=1 // pred_region
      _
    $region21: #{tpu_custom_call.1} parent=1 // pred_fallthru
      _
    // Predicated region
    $region22: #{tpu_custom_call.1} parent=1 // pred_check
      _
    $region23: #{tpu_custom_call.1} parent=1 // pred_check_branch
      %36 = sbr.rel (0) target = $region25
    $region24: #{tpu_custom_call.1} parent=1 // pred_region
      %s38 = ssub.s32 2048, 2048
      %39 = vsyncadd [#allocation6], %s38
      %s40 = sshll.u32 [#allocation5], 4
      %s41 = int_to_ptr.vmem [resolvable:$true] %s40
      %46 = dma.hbm_to_vmem [thread:$0]  %s5, 2048, %s41, [#allocation6], 64, 64, 4
    $region25: #{tpu_custom_call.1} parent=1 // pred_fallthru
      _
    // Predicated region
    $region26: #{tpu_custom_call.1} parent=1 // pred_check
      _
    $region27: #{tpu_custom_call.1} parent=1 // pred_check_branch
      %48 = sbr.rel (0) target = $region29
    $region28: #{tpu_custom_call.1} parent=1 // pred_region
      _
    $region29: #{tpu_custom_call.1} parent=1 // pred_fallthru
      _
    // Predicated region
    $region30: #{tpu_custom_call.1} parent=1 // pred_check
      _
    $region31: #{tpu_custom_call.1} parent=1 // pred_check_branch
      %50 = sbr.rel (0) target = $region33
    $region32: #{tpu_custom_call.1} parent=1 // pred_region
      %51 = dma.done [#allocation3], 1024
    $region33: #{tpu_custom_call.1} parent=1 // pred_fallthru
      _
    // Predicated region
    $region34: #{tpu_custom_call.1} parent=1 // pred_check
      _
    $region35: #{tpu_custom_call.1} parent=1 // pred_check_branch
      %53 = sbr.rel (0) target = $region37
    $region36: #{tpu_custom_call.1} parent=1 // pred_region
      %54 = dma.done [#allocation6], 2048
    $region37: #{tpu_custom_call.1} parent=1 // pred_fallthru
      _
    %v56 = vld [vmem:[%s0] sm:$0xff]
    %v57 = vld [vmem:[%s0 + $0x8] sm:$0xff]
    %v58 = vld [vmem:[%s0 + $0x10] sm:$0xff]
    %v59 = vld [vmem:[%s0 + $0x18] sm:$0xff]
    %v60 = vld [vmem:[%s0 + $0x20] sm:$0xff]
    %v61 = vld [vmem:[%s0 + $0x28] sm:$0xff]
    %v62 = vld [vmem:[%s0 + $0x30] sm:$0xff]
    %v63 = vld [vmem:[%s0 + $0x38] sm:$0xff]
    %v64 = vlaneseq
    %v65 = vand.u32 %v64, 127
    %66 = vset.pattern.permute.xlu0 0
    %67 = vperm.xlu0 %66, %v56
    %v68 = vpop.permute.xlu0 %67
    %69 = vset.pattern.permute.xlu0 0
    %70 = vperm.xlu0 %69, %v57
    %v71 = vpop.permute.xlu0 %70
    %72 = vset.pattern.permute.xlu0 0
    %73 = vperm.xlu0 %72, %v58
    %v74 = vpop.permute.xlu0 %73
    %75 = vset.pattern.permute.xlu0 0
    %76 = vperm.xlu0 %75, %v59
    %v77 = vpop.permute.xlu0 %76
    %78 = vset.pattern.permute.xlu0 0
    %79 = vperm.xlu0 %78, %v60
    %v80 = vpop.permute.xlu0 %79
    %81 = vset.pattern.permute.xlu0 0
    %82 = vperm.xlu0 %81, %v61
    %v83 = vpop.permute.xlu0 %82
    %84 = vset.pattern.permute.xlu0 0
    %85 = vperm.xlu0 %84, %v62
    %v86 = vpop.permute.xlu0 %85
    %87 = vset.pattern.permute.xlu0 0
    %88 = vperm.xlu0 %87, %v63
    %v89 = vpop.permute.xlu0 %88
    %vm90 = vcmp.eq.s32.totalorder %v68, %v65
    %vm91 = vcmp.eq.s32.totalorder %v71, %v65
    %vm92 = vcmp.eq.s32.totalorder %v74, %v65
    %vm93 = vcmp.eq.s32.totalorder %v77, %v65
    %vm94 = vcmp.eq.s32.totalorder %v80, %v65
    %vm95 = vcmp.eq.s32.totalorder %v83, %v65
    %vm96 = vcmp.eq.s32.totalorder %v86, %v65
    %vm97 = vcmp.eq.s32.totalorder %v89, %v65
    %v98 = vsel %vm90, 1, 0
    %v99 = vsel %vm91, 1, 0
    %v100 = vsel %vm92, 1, 0
    %v101 = vsel %vm93, 1, 0
    %v102 = vsel %vm94, 1, 0
    %v103 = vsel %vm95, 1, 0
    %v104 = vsel %vm96, 1, 0
    %v105 = vsel %vm97, 1, 0
    %v106 = vcvt.s32.f32 %v98
    %v107 = vcvt.s32.f32 %v99
    %v108 = vcvt.s32.f32 %v100
    %v109 = vcvt.s32.f32 %v101
    %v110 = vcvt.s32.f32 %v102
    %v111 = vcvt.s32.f32 %v103
    %v112 = vcvt.s32.f32 %v104
    %v113 = vcvt.s32.f32 %v105
    %v114 = vpack.c.bf16 %v107, %v106
    %v115 = vpack.c.bf16 %v109, %v108
    %v116 = vpack.c.bf16 %v111, %v110
    %v117 = vpack.c.bf16 %v113, %v112
    %v118 = vld [vmem:[#allocation2] sm:$0xf]
    %v119 = vld [vmem:[#allocation2 + $0x4] sm:$0xf]
    %v120 = vld [vmem:[#allocation2 + $0x8] sm:$0xf]
    %v121 = vld [vmem:[#allocation2 + $0xc] sm:$0xf]
    %v122 = vld [vmem:[#allocation2 + $0x10] sm:$0xf]
    %v123 = vld [vmem:[#allocation2 + $0x14] sm:$0xf]
    %v124 = vld [vmem:[#allocation2 + $0x18] sm:$0xf]
    %v125 = vld [vmem:[#allocation2 + $0x1c] sm:$0xf]
    %v126 = vld [vmem:[#allocation2 + $0x20] sm:$0xf]
    %v127 = vld [vmem:[#allocation2 + $0x24] sm:$0xf]
    %v128 = vld [vmem:[#allocation2 + $0x28] sm:$0xf]
    %v129 = vld [vmem:[#allocation2 + $0x2c] sm:$0xf]
    %v130 = vld [vmem:[#allocation2 + $0x30] sm:$0xf]
    %v131 = vld [vmem:[#allocation2 + $0x34] sm:$0xf]
    %v132 = vld [vmem:[#allocation2 + $0x38] sm:$0xf]
    %v133 = vld [vmem:[#allocation2 + $0x3c] sm:$0xf]
    %v150 = vunpack.c.l.b16 %v118
    %v151 = vunpack.c.l.b16 %v119
    %v152 = vunpack.c.l.b16 %v120
    %v153 = vunpack.c.l.b16 %v121
    %v154 = vunpack.c.l.b16 %v122
    %v155 = vunpack.c.l.b16 %v123
    %v156 = vunpack.c.l.b16 %v124
    %v157 = vunpack.c.l.b16 %v125
    %v158 = vunpack.c.l.b16 %v126
    %v159 = vunpack.c.l.b16 %v127
    %v160 = vunpack.c.l.b16 %v128
    %v161 = vunpack.c.l.b16 %v129
    %v162 = vunpack.c.l.b16 %v130
    %v163 = vunpack.c.l.b16 %v131
    %v164 = vunpack.c.l.b16 %v132
    %v165 = vunpack.c.l.b16 %v133
    %v166 = vpack.c.b16 %v151, %v150
    %v167 = vpack.c.b16 %v153, %v152
    %v168 = vpack.c.b16 %v155, %v154
    %v169 = vpack.c.b16 %v157, %v156
    %v170 = vpack.c.b16 %v159, %v158
    %v171 = vpack.c.b16 %v161, %v160
    %v172 = vpack.c.b16 %v163, %v162
    %v173 = vpack.c.b16 %v165, %v164
    %182 = vmatprep.subr.bf16.mxu0 0
    %183 = vmatpush1.bf16.msra.mxu0 %v166
    %184 = vmatprep.subr.bf16.mxu0 0
    %185 = vmatpush1.bf16.msra.mxu0 %v167
    %186 = vmatprep.subr.bf16.mxu0 0
    %187 = vmatpush1.bf16.msra.mxu0 %v168
    %188 = vmatprep.subr.bf16.mxu0 0
    %189 = vmatpush1.bf16.msra.mxu0 %v169
    %190 = vmatprep.subr.bf16.mxu0 0
    %191 = vmatpush1.bf16.msra.mxu0 %v170
    %192 = vmatprep.subr.bf16.mxu0 0
    %193 = vmatpush1.bf16.msra.mxu0 %v171
    %194 = vmatprep.subr.bf16.mxu0 0
    %195 = vmatpush1.bf16.msra.mxu0 %v172
    %196 = vmatprep.subr.bf16.mxu0 0
    %197 = vmatpush1.bf16.msra.mxu0 %v173
    %198 = vmatprep.subr.bf16.mxu0 0
    %199 = vmatpush1.bf16.msra.mxu0 0
    %200 = vmatprep.subr.bf16.mxu0 0
    %201 = vmatpush1.bf16.msra.mxu0 0
    %202 = vmatprep.subr.bf16.mxu0 0
    %203 = vmatpush1.bf16.msra.mxu0 0
    %204 = vmatprep.subr.bf16.mxu0 0
    %205 = vmatpush1.bf16.msra.mxu0 0
    %206 = vmatprep.subr.bf16.mxu0 0
    %207 = vmatpush1.bf16.msra.mxu0 0
    %208 = vmatprep.subr.bf16.mxu0 0
    %209 = vmatpush1.bf16.msra.mxu0 0
    %210 = vmatprep.subr.bf16.mxu0 0
    %211 = vmatpush1.bf16.msra.mxu0 0
    %212 = vmatprep.subr.bf16.mxu0 0
    %213 = vmatpush1.bf16.msra.mxu0 0
    %214 = vmatprep.mubr.bf16.mxu0 0
    %215 = vmatmul.mubr.bf16.gmra.mrb[0].mxu0 %v114
    %v216 = vpop.f32.mrb[0].mxu0
    %v217 = vadd.f32 0.0, %v216
    %v218 = vpop.f32.mrb[0].mxu0
    %v219 = vpop.f32.mrb[0].mxu0
    %v220 = vadd.f32 0.0, %v219
    %v221 = vpop.f32.mrb[0].mxu0
    %222 = vmatprep.mubr.bf16.mxu0 0
    %223 = vmatmul.mubr.bf16.gmra.mrb[0].mxu0 %v115
    %v224 = vpop.f32.mrb[0].mxu0
    %v225 = vadd.f32 0.0, %v224
    %v226 = vpop.f32.mrb[0].mxu0
    %v227 = vpop.f32.mrb[0].mxu0
    %v228 = vadd.f32 0.0, %v227
    %v229 = vpop.f32.mrb[0].mxu0
    %230 = vmatprep.mubr.bf16.mxu0 0
    %231 = vmatmul.mubr.bf16.gmra.mrb[0].mxu0 %v116
    %v232 = vpop.f32.mrb[0].mxu0
    %v233 = vadd.f32 0.0, %v232
    %v234 = vpop.f32.mrb[0].mxu0
    %v235 = vpop.f32.mrb[0].mxu0
    %v236 = vadd.f32 0.0, %v235
    %v237 = vpop.f32.mrb[0].mxu0
    %238 = vmatprep.mubr.bf16.mxu0 0
    %239 = vmatmul.mubr.bf16.gmra.mrb[0].mxu0 %v117
    %v240 = vpop.f32.mrb[0].mxu0
    %v241 = vadd.f32 0.0, %v240
    %v242 = vpop.f32.mrb[0].mxu0
    %v243 = vpop.f32.mrb[0].mxu0
    %v244 = vadd.f32 0.0, %v243
    %v245 = vpop.f32.mrb[0].mxu0
    %246 = vdwg.mxu0
    %v247 = vpack.c.bf16 %v220, %v217
    %v248 = vpack.c.bf16 %v228, %v225
    %v249 = vpack.c.bf16 %v236, %v233
    %v250 = vpack.c.bf16 %v244, %v241
    %v251 = vld [vmem:[%s3] sm:$0xff]
    %v252 = vld [vmem:[%s3 + $0x8] sm:$0xff]
    %v253 = vld [vmem:[%s3 + $0x10] sm:$0xff]
    %v254 = vld [vmem:[%s3 + $0x18] sm:$0xff]
    %v255 = vld [vmem:[%s3 + $0x20] sm:$0xff]
    %v256 = vld [vmem:[%s3 + $0x28] sm:$0xff]
    %v257 = vld [vmem:[%s3 + $0x30] sm:$0xff]
    %v258 = vld [vmem:[%s3 + $0x38] sm:$0xff]
    %v259 = vld [vmem:[%s3 + $0x40] sm:$0xff]
    %v260 = vld [vmem:[%s3 + $0x48] sm:$0xff]
    %v261 = vld [vmem:[%s3 + $0x50] sm:$0xff]
    %v262 = vld [vmem:[%s3 + $0x58] sm:$0xff]
    %v263 = vld [vmem:[%s3 + $0x60] sm:$0xff]
    %v264 = vld [vmem:[%s3 + $0x68] sm:$0xff]
    %v265 = vld [vmem:[%s3 + $0x70] sm:$0xff]
    %v266 = vld [vmem:[%s3 + $0x78] sm:$0xff]
    %v267 = vld [vmem:[%s4] sm:$0x3]
    %v269 = vlaneseq
    %v270 = vshrl.u32 %v269, 7
    %v271 = vsub.s32 0, %v270
    %v272 = vrot.slane %v267, %v271
    %v273 = vlaneseq
    %v274 = vshrl.u32 %v273, 7
    %v275 = vsub.s32 1, %v274
    %v276 = vrot.slane %v267, %v275
    %v295 = vunpack.c.l.b16 %v251
    %v296 = vunpack.c.h.b16 %v251
    %v297 = vunpack.c.l.b16 %v252
    %v298 = vunpack.c.h.b16 %v252
    %v299 = vunpack.c.l.b16 %v253
    %v300 = vunpack.c.h.b16 %v253
    %v301 = vunpack.c.l.b16 %v254
    %v302 = vunpack.c.h.b16 %v254
    %v303 = vunpack.c.l.b16 %v255
    %v304 = vunpack.c.h.b16 %v255
    %v305 = vunpack.c.l.b16 %v256
    %v306 = vunpack.c.h.b16 %v256
    %v307 = vunpack.c.l.b16 %v257
    %v308 = vunpack.c.h.b16 %v257
    %v309 = vunpack.c.l.b16 %v258
    %v310 = vunpack.c.h.b16 %v258
    %v311 = vunpack.c.l.b16 %v259
    %v312 = vunpack.c.h.b16 %v259
    %v313 = vunpack.c.l.b16 %v260
    %v314 = vunpack.c.h.b16 %v260
    %v315 = vunpack.c.l.b16 %v261
    %v316 = vunpack.c.h.b16 %v261
    %v317 = vunpack.c.l.b16 %v262
    %v318 = vunpack.c.h.b16 %v262
    %v319 = vunpack.c.l.b16 %v263
    %v320 = vunpack.c.h.b16 %v263
    %v321 = vunpack.c.l.b16 %v264
    %v322 = vunpack.c.h.b16 %v264
    %v323 = vunpack.c.l.b16 %v265
    %v324 = vunpack.c.h.b16 %v265
    %v325 = vunpack.c.l.b16 %v266
    %v326 = vunpack.c.h.b16 %v266
    %v327 = vpack.c.b16 %v297, %v295
    %v328 = vpack.c.b16 %v298, %v296
    %v329 = vpack.c.b16 %v301, %v299
    %v330 = vpack.c.b16 %v302, %v300
    %v331 = vpack.c.b16 %v305, %v303
    %v332 = vpack.c.b16 %v306, %v304
    %v333 = vpack.c.b16 %v309, %v307
    %v334 = vpack.c.b16 %v310, %v308
    %v335 = vpack.c.b16 %v313, %v311
    %v336 = vpack.c.b16 %v314, %v312
    %v337 = vpack.c.b16 %v317, %v315
    %v338 = vpack.c.b16 %v318, %v316
    %v339 = vpack.c.b16 %v321, %v319
    %v340 = vpack.c.b16 %v322, %v320
    %v341 = vpack.c.b16 %v325, %v323
    %v342 = vpack.c.b16 %v326, %v324
    %359 = vmatprep.subr.bf16.mxu0 %v328
    %360 = vmatpush1.bf16.msra.mxu0 %v327
    %361 = vmatprep.subr.bf16.mxu0 %v330
    %362 = vmatpush1.bf16.msra.mxu0 %v329
    %363 = vmatprep.subr.bf16.mxu0 %v332
    %364 = vmatpush1.bf16.msra.mxu0 %v331
    %365 = vmatprep.subr.bf16.mxu0 %v334
    %366 = vmatpush1.bf16.msra.mxu0 %v333
    %367 = vmatprep.subr.bf16.mxu0 %v336
    %368 = vmatpush1.bf16.msra.mxu0 %v335
    %369 = vmatprep.subr.bf16.mxu0 %v338
    %370 = vmatpush1.bf16.msra.mxu0 %v337
    %371 = vmatprep.subr.bf16.mxu0 %v340
    %372 = vmatpush1.bf16.msra.mxu0 %v339
    %373 = vmatprep.subr.bf16.mxu0 %v342
    %374 = vmatpush1.bf16.msra.mxu0 %v341
    %375 = vmatprep.subr.bf16.mxu0 0
    %376 = vmatpush1.bf16.msra.mxu0 0
    %377 = vmatprep.subr.bf16.mxu0 0
    %378 = vmatpush1.bf16.msra.mxu0 0
    %379 = vmatprep.subr.bf16.mxu0 0
    %380 = vmatpush1.bf16.msra.mxu0 0
    %381 = vmatprep.subr.bf16.mxu0 0
    %382 = vmatpush1.bf16.msra.mxu0 0
    %383 = vmatprep.subr.bf16.mxu0 0
    %384 = vmatpush1.bf16.msra.mxu0 0
    %385 = vmatprep.subr.bf16.mxu0 0
    %386 = vmatpush1.bf16.msra.mxu0 0
    %387 = vmatprep.subr.bf16.mxu0 0
    %388 = vmatpush1.bf16.msra.mxu0 0
    %389 = vmatprep.subr.bf16.mxu0 0
    %390 = vmatpush1.bf16.msra.mxu0 0
    %391 = vmatprep.mubr.bf16.mxu0 0
    %392 = vmatmul.mubr.bf16.gmra.mrb[0].mxu0 %v247
    %v393 = vpop.f32.mrb[0].mxu0
    %v394 = vadd.f32 %v272, %v393
    %v395 = vpop.f32.mrb[0].mxu0
    %v396 = vadd.f32 %v276, %v395
    %v397 = vpop.f32.mrb[0].mxu0
    %v398 = vadd.f32 %v272, %v397
    %v399 = vpop.f32.mrb[0].mxu0
    %v400 = vadd.f32 %v276, %v399
    %401 = vmatprep.mubr.bf16.mxu0 0
    %402 = vmatmul.mubr.bf16.gmra.mrb[0].mxu0 %v248
    %v403 = vpop.f32.mrb[0].mxu0
    %v404 = vadd.f32 %v272, %v403
    %v405 = vpop.f32.mrb[0].mxu0
    %v406 = vadd.f32 %v276, %v405
    %v407 = vpop.f32.mrb[0].mxu0
    %v408 = vadd.f32 %v272, %v407
    %v409 = vpop.f32.mrb[0].mxu0
    %v410 = vadd.f32 %v276, %v409
    %411 = vmatprep.mubr.bf16.mxu0 0
    %412 = vmatmul.mubr.bf16.gmra.mrb[0].mxu0 %v249
    %v413 = vpop.f32.mrb[0].mxu0
    %v414 = vadd.f32 %v272, %v413
    %v415 = vpop.f32.mrb[0].mxu0
    %v416 = vadd.f32 %v276, %v415
    %v417 = vpop.f32.mrb[0].mxu0
    %v418 = vadd.f32 %v272, %v417
    %v419 = vpop.f32.mrb[0].mxu0
    %v420 = vadd.f32 %v276, %v419
    %421 = vmatprep.mubr.bf16.mxu0 0
    %422 = vmatmul.mubr.bf16.gmra.mrb[0].mxu0 %v250
    %v423 = vpop.f32.mrb[0].mxu0
    %v424 = vadd.f32 %v272, %v423
    %v425 = vpop.f32.mrb[0].mxu0
    %v426 = vadd.f32 %v276, %v425
    %v427 = vpop.f32.mrb[0].mxu0
    %v428 = vadd.f32 %v272, %v427
    %v429 = vpop.f32.mrb[0].mxu0
    %v430 = vadd.f32 %v276, %v429
    %431 = vdwg.mxu0
    %v432 = vmax.f32 %v394, 0.0
    %v433 = vmax.f32 %v396, 0.0
    %v434 = vmax.f32 %v398, 0.0
    %v435 = vmax.f32 %v400, 0.0
    %v436 = vmax.f32 %v404, 0.0
    %v437 = vmax.f32 %v406, 0.0
    %v438 = vmax.f32 %v408, 0.0
    %v439 = vmax.f32 %v410, 0.0
    %v440 = vmax.f32 %v414, 0.0
    %v441 = vmax.f32 %v416, 0.0
    %v442 = vmax.f32 %v418, 0.0
    %v443 = vmax.f32 %v420, 0.0
    %v444 = vmax.f32 %v424, 0.0
    %v445 = vmax.f32 %v426, 0.0
    %v446 = vmax.f32 %v428, 0.0
    %v447 = vmax.f32 %v430, 0.0
    %v448 = vpack.c.bf16 %v434, %v432
    %v449 = vpack.c.bf16 %v435, %v433
    %v450 = vpack.c.bf16 %v438, %v436
    %v451 = vpack.c.bf16 %v439, %v437
    %v452 = vpack.c.bf16 %v442, %v440
    %v453 = vpack.c.bf16 %v443, %v441
    %v454 = vpack.c.bf16 %v446, %v444
    %v455 = vpack.c.bf16 %v447, %v445
    %v456 = vld [vmem:[#allocation5] sm:$0xf]
    %v457 = vld [vmem:[#allocation5 + $0x4] sm:$0xf]
    %v458 = vld [vmem:[#allocation5 + $0x8] sm:$0xf]
    %v459 = vld [vmem:[#allocation5 + $0xc] sm:$0xf]
    %v460 = vld [vmem:[#allocation5 + $0x10] sm:$0xf]
    %v461 = vld [vmem:[#allocation5 + $0x14] sm:$0xf]
    %v462 = vld [vmem:[#allocation5 + $0x18] sm:$0xf]
    %v463 = vld [vmem:[#allocation5 + $0x1c] sm:$0xf]
    %v464 = vld [vmem:[#allocation5 + $0x20] sm:$0xf]
    %v465 = vld [vmem:[#allocation5 + $0x24] sm:$0xf]
    %v466 = vld [vmem:[#allocation5 + $0x28] sm:$0xf]
    %v467 = vld [vmem:[#allocation5 + $0x2c] sm:$0xf]
    %v468 = vld [vmem:[#allocation5 + $0x30] sm:$0xf]
    %v469 = vld [vmem:[#allocation5 + $0x34] sm:$0xf]
    %v470 = vld [vmem:[#allocation5 + $0x38] sm:$0xf]
    %v471 = vld [vmem:[#allocation5 + $0x3c] sm:$0xf]
    %v472 = vld [vmem:[#allocation5 + $0x40] sm:$0xf]
    %v473 = vld [vmem:[#allocation5 + $0x44] sm:$0xf]
    %v474 = vld [vmem:[#allocation5 + $0x48] sm:$0xf]
    %v475 = vld [vmem:[#allocation5 + $0x4c] sm:$0xf]
    %v476 = vld [vmem:[#allocation5 + $0x50] sm:$0xf]
    %v477 = vld [vmem:[#allocation5 + $0x54] sm:$0xf]
    %v478 = vld [vmem:[#allocation5 + $0x58] sm:$0xf]
    %v479 = vld [vmem:[#allocation5 + $0x5c] sm:$0xf]
    %v480 = vld [vmem:[#allocation5 + $0x60] sm:$0xf]
    %v481 = vld [vmem:[#allocation5 + $0x64] sm:$0xf]
    %v482 = vld [vmem:[#allocation5 + $0x68] sm:$0xf]
    %v483 = vld [vmem:[#allocation5 + $0x6c] sm:$0xf]
    %v484 = vld [vmem:[#allocation5 + $0x70] sm:$0xf]
    %v485 = vld [vmem:[#allocation5 + $0x74] sm:$0xf]
    %v486 = vld [vmem:[#allocation5 + $0x78] sm:$0xf]
    %v487 = vld [vmem:[#allocation5 + $0x7c] sm:$0xf]
    %v488 = vld [vmem:[%s6] sm:$0x1]
    %v490 = vlaneseq
    %v491 = vshrl.u32 %v490, 7
    %v492 = vsub.s32 0, %v491
    %v493 = vrot.slane %v488, %v492
    %v527 = vunpack.c.l.b16 %v456
    %v528 = vunpack.c.l.b16 %v457
    %v529 = vunpack.c.l.b16 %v458
    %v530 = vunpack.c.l.b16 %v459
    %v531 = vunpack.c.l.b16 %v460
    %v532 = vunpack.c.l.b16 %v461
    %v533 = vunpack.c.l.b16 %v462
    %v534 = vunpack.c.l.b16 %v463
    %v535 = vunpack.c.l.b16 %v464
    %v536 = vunpack.c.l.b16 %v465
    %v537 = vunpack.c.l.b16 %v466
    %v538 = vunpack.c.l.b16 %v467
    %v539 = vunpack.c.l.b16 %v468
    %v540 = vunpack.c.l.b16 %v469
    %v541 = vunpack.c.l.b16 %v470
    %v542 = vunpack.c.l.b16 %v471
    %v543 = vunpack.c.l.b16 %v472
    %v544 = vunpack.c.l.b16 %v473
    %v545 = vunpack.c.l.b16 %v474
    %v546 = vunpack.c.l.b16 %v475
    %v547 = vunpack.c.l.b16 %v476
    %v548 = vunpack.c.l.b16 %v477
    %v549 = vunpack.c.l.b16 %v478
    %v550 = vunpack.c.l.b16 %v479
    %v551 = vunpack.c.l.b16 %v480
    %v552 = vunpack.c.l.b16 %v481
    %v553 = vunpack.c.l.b16 %v482
    %v554 = vunpack.c.l.b16 %v483
    %v555 = vunpack.c.l.b16 %v484
    %v556 = vunpack.c.l.b16 %v485
    %v557 = vunpack.c.l.b16 %v486
    %v558 = vunpack.c.l.b16 %v487
    %v559 = vpack.c.b16 %v528, %v527
    %v560 = vpack.c.b16 %v530, %v529
    %v561 = vpack.c.b16 %v532, %v531
    %v562 = vpack.c.b16 %v534, %v533
    %v563 = vpack.c.b16 %v536, %v535
    %v564 = vpack.c.b16 %v538, %v537
    %v565 = vpack.c.b16 %v540, %v539
    %v566 = vpack.c.b16 %v542, %v541
    %v567 = vpack.c.b16 %v544, %v543
    %v568 = vpack.c.b16 %v546, %v545
    %v569 = vpack.c.b16 %v548, %v547
    %v570 = vpack.c.b16 %v550, %v549
    %v571 = vpack.c.b16 %v552, %v551
    %v572 = vpack.c.b16 %v554, %v553
    %v573 = vpack.c.b16 %v556, %v555
    %v574 = vpack.c.b16 %v558, %v557
    %591 = vmatprep.subr.bf16.mxu0 0
    %592 = vmatpush1.bf16.msra.mxu0 %v559
    %593 = vmatprep.subr.bf16.mxu0 0
    %594 = vmatpush1.bf16.msra.mxu0 %v560
    %595 = vmatprep.subr.bf16.mxu0 0
    %596 = vmatpush1.bf16.msra.mxu0 %v561
    %597 = vmatprep.subr.bf16.mxu0 0
    %598 = vmatpush1.bf16.msra.mxu0 %v562
    %599 = vmatprep.subr.bf16.mxu0 0
    %600 = vmatpush1.bf16.msra.mxu0 %v563
    %601 = vmatprep.subr.bf16.mxu0 0
    %602 = vmatpush1.bf16.msra.mxu0 %v564
    %603 = vmatprep.subr.bf16.mxu0 0
    %604 = vmatpush1.bf16.msra.mxu0 %v565
    %605 = vmatprep.subr.bf16.mxu0 0
    %606 = vmatpush1.bf16.msra.mxu0 %v566
    %607 = vmatprep.subr.bf16.mxu0 0
    %608 = vmatpush1.bf16.msra.mxu0 %v567
    %609 = vmatprep.subr.bf16.mxu0 0
    %610 = vmatpush1.bf16.msra.mxu0 %v568
    %611 = vmatprep.subr.bf16.mxu0 0
    %612 = vmatpush1.bf16.msra.mxu0 %v569
    %613 = vmatprep.subr.bf16.mxu0 0
    %614 = vmatpush1.bf16.msra.mxu0 %v570
    %615 = vmatprep.subr.bf16.mxu0 0
    %616 = vmatpush1.bf16.msra.mxu0 %v571
    %617 = vmatprep.subr.bf16.mxu0 0
    %618 = vmatpush1.bf16.msra.mxu0 %v572
    %619 = vmatprep.subr.bf16.mxu0 0
    %620 = vmatpush1.bf16.msra.mxu0 %v573
    %621 = vmatprep.subr.bf16.mxu0 0
    %622 = vmatpush1.bf16.msra.mxu0 %v574
    %623 = vmatprep.mubr.bf16.mxu0 %v449
    %624 = vmatmul.mubr.bf16.gmra.mrb[0].mxu0 %v448
    %v625 = vpop.f32.mrb[0].mxu0
    %v626 = vadd.f32 %v493, %v625
    %v627 = vpop.f32.mrb[0].mxu0
    %v628 = vpop.f32.mrb[0].mxu0
    %v629 = vadd.f32 %v493, %v628
    %v630 = vpop.f32.mrb[0].mxu0
    %631 = vmatprep.mubr.bf16.mxu0 %v451
    %632 = vmatmul.mubr.bf16.gmra.mrb[0].mxu0 %v450
    %v633 = vpop.f32.mrb[0].mxu0
    %v634 = vadd.f32 %v493, %v633
    %v635 = vpop.f32.mrb[0].mxu0
    %v636 = vpop.f32.mrb[0].mxu0
    %v637 = vadd.f32 %v493, %v636
    %v638 = vpop.f32.mrb[0].mxu0
    %639 = vmatprep.mubr.bf16.mxu0 %v453
    %640 = vmatmul.mubr.bf16.gmra.mrb[0].mxu0 %v452
    %v641 = vpop.f32.mrb[0].mxu0
    %v642 = vadd.f32 %v493, %v641
    %v643 = vpop.f32.mrb[0].mxu0
    %v644 = vpop.f32.mrb[0].mxu0
    %v645 = vadd.f32 %v493, %v644
    %v646 = vpop.f32.mrb[0].mxu0
    %647 = vmatprep.mubr.bf16.mxu0 %v455
    %648 = vmatmul.mubr.bf16.gmra.mrb[0].mxu0 %v454
    %v649 = vpop.f32.mrb[0].mxu0
    %v650 = vadd.f32 %v493, %v649
    %v651 = vpop.f32.mrb[0].mxu0
    %v652 = vpop.f32.mrb[0].mxu0
    %v653 = vadd.f32 %v493, %v652
    %v654 = vpop.f32.mrb[0].mxu0
    %655 = vdwg.mxu0
    %v656 = vld [vmem:[%s1] sm:$0xff]
    %v657 = vld [vmem:[%s1 + $0x8] sm:$0xff]
    %v658 = vld [vmem:[%s1 + $0x10] sm:$0xff]
    %v659 = vld [vmem:[%s1 + $0x18] sm:$0xff]
    %v660 = vld [vmem:[%s1 + $0x20] sm:$0xff]
    %v661 = vld [vmem:[%s1 + $0x28] sm:$0xff]
    %v662 = vld [vmem:[%s1 + $0x30] sm:$0xff]
    %v663 = vld [vmem:[%s1 + $0x38] sm:$0xff]
    %665 = vset.pattern.permute.xlu0 0
    %666 = vperm.xlu0 %665, %v656
    %v667 = vpop.permute.xlu0 %666
    %670 = vset.pattern.permute.xlu0 0
    %671 = vperm.xlu0 %670, %v657
    %v672 = vpop.permute.xlu0 %671
    %675 = vset.pattern.permute.xlu0 0
    %676 = vperm.xlu0 %675, %v658
    %v677 = vpop.permute.xlu0 %676
    %680 = vset.pattern.permute.xlu0 0
    %681 = vperm.xlu0 %680, %v659
    %v682 = vpop.permute.xlu0 %681
    %685 = vset.pattern.permute.xlu0 0
    %686 = vperm.xlu0 %685, %v660
    %v687 = vpop.permute.xlu0 %686
    %690 = vset.pattern.permute.xlu0 0
    %691 = vperm.xlu0 %690, %v661
    %v692 = vpop.permute.xlu0 %691
    %695 = vset.pattern.permute.xlu0 0
    %696 = vperm.xlu0 %695, %v662
    %v697 = vpop.permute.xlu0 %696
    %700 = vset.pattern.permute.xlu0 0
    %701 = vperm.xlu0 %700, %v663
    %v702 = vpop.permute.xlu0 %701
    %v704 = vmul.f32 %v626, %v667
    %v705 = vmul.f32 %v629, %v672
    %v706 = vmul.f32 %v634, %v677
    %v707 = vmul.f32 %v637, %v682
    %v708 = vmul.f32 %v642, %v687
    %v709 = vmul.f32 %v645, %v692
    %v710 = vmul.f32 %v650, %v697
    %v711 = vmul.f32 %v653, %v702
    %v712 = vpack.c.bf16 %v705, %v704
    %v713 = vpack.c.bf16 %v707, %v706
    %v714 = vpack.c.bf16 %v709, %v708
    %v715 = vpack.c.bf16 %v711, %v710
    %v720 = vunpack.c.l.b16 %v712
    %v721 = vunpack.c.h.b16 %v712
    %v722 = vunpack.c.l.b16 %v713
    %v723 = vunpack.c.h.b16 %v713
    %v724 = vunpack.c.l.b16 %v714
    %v725 = vunpack.c.h.b16 %v714
    %v726 = vunpack.c.l.b16 %v715
    %v727 = vunpack.c.h.b16 %v715
    %v728 = vpack.c.b16 %v720, %v720
    %v729 = vpack.c.b16 %v721, %v721
    %v730 = vpack.c.b16 %v722, %v722
    %v731 = vpack.c.b16 %v723, %v723
    %v732 = vpack.c.b16 %v724, %v724
    %v733 = vpack.c.b16 %v725, %v725
    %v734 = vpack.c.b16 %v726, %v726
    %v735 = vpack.c.b16 %v727, %v727
    %744 = vst [vmem:[#allocation7] sm:$0xf] %v728
    %745 = vst [vmem:[#allocation7 + $0x4] sm:$0xf] %v729
    %746 = vst [vmem:[#allocation7 + $0x8] sm:$0xf] %v730
    %747 = vst [vmem:[#allocation7 + $0xc] sm:$0xf] %v731
    %748 = vst [vmem:[#allocation7 + $0x10] sm:$0xf] %v732
    %749 = vst [vmem:[#allocation7 + $0x14] sm:$0xf] %v733
    %750 = vst [vmem:[#allocation7 + $0x18] sm:$0xf] %v734
    %751 = vst [vmem:[#allocation7 + $0x1c] sm:$0xf] %v735
    // Predicated region
    $region38: #{tpu_custom_call.1} parent=1 // pred_check
      _
    $region39: #{tpu_custom_call.1} parent=1 // pred_check_branch
      %753 = sbr.rel (0) target = $region41
    $region40: #{tpu_custom_call.1} parent=1 // pred_region
      %s755 = ssub.s32 512, 512
      %756 = vsyncadd [#allocation4], %s755
      %s757 = sshll.u32 [#allocation7], 4
      %s758 = int_to_ptr.vmem [resolvable:$true] %s757
      %763 = dma.vmem_to_hbm [thread:$0]  %s758, 512, %s7, [#allocation4], 64, 64, 4
    $region41: #{tpu_custom_call.1} parent=1 // pred_fallthru
      _
    // Predicated region
    $region42: #{tpu_custom_call.1} parent=1 // pred_check
      _
    $region43: #{tpu_custom_call.1} parent=1 // pred_check_branch
      %765 = sbr.rel (0) target = $region45
    $region44: #{tpu_custom_call.1} parent=1 // pred_region
      %766 = dma.done [#allocation4], 512
    $region45: #{tpu_custom_call.1} parent=1 // pred_fallthru
      _
    %767 = vsyncpa [#allocation3], 1
    %768 = vsyncpa [#allocation6], 1
    %769 = vsyncpa [#allocation4], 1

// kernel: tpu_custom_call.1
$region0: #{tpu_custom_call.1}
  #allocation0 [shape = 'u32[]', space=smem, size = 0x4, offset = 0x4, fixed_abs, tag = 'smem constant byte address 0x4 - core index']
  #allocation1 [shape = 'u32[144,128]{1,0:T(1,128)}', space=vmem, size = 0x12000, scoped, tag = 'internal scratch']
  %s0 = inlined_call_operand.vmem [shape: s32[64,1], index: 0, kind: input, shape index: {}]
  %s1 = inlined_call_operand.vmem [shape: f32[64,1], index: 1, kind: input, shape index: {}]
  %s2 = inlined_call_operand.hbm [shape: bf16[128,128], index: 2, kind: input, shape index: {}]
  %s3 = inlined_call_operand.vmem [shape: bf16[128,256], index: 3, kind: input, shape index: {}]
  %s4 = inlined_call_operand.vmem [shape: f32[1,256], index: 4, kind: input, shape index: {}]
  %s5 = inlined_call_operand.hbm [shape: bf16[256,128], index: 5, kind: input, shape index: {}]
  %s6 = inlined_call_operand.vmem [shape: f32[1,128], index: 6, kind: input, shape index: {}]
  %s7 = inlined_call_operand.hbm [shape: bf16[64,128], index: 7, kind: output, shape index: {}]
  %s8 = sld [smem:[#allocation0]]
  $region46: #{tpu_custom_call.1} parent=0
    _
  %s10 = ssub.s32 1, %s8
  %s11 = scalar_select 0, %s10, %s8
  $region1: #{tpu_custom_call.1} parent=0
    #allocation2 [shape = 'u8[32768]{0}', space=vmem, size = 0x8000, scoped, tag = 'input window, operand 2, single buffered']
    #allocation3 [shape = 's32[1]{0}', space=sflag, size = 0x4, scoped, tag = 'scoped memory for tpu_custom_call.1']
    #allocation4 [shape = 's32[1]{0}', space=sflag, size = 0x4, scoped, tag = 'scoped memory for tpu_custom_call.1']
    #allocation5 [shape = 'u8[65536]{0}', space=vmem, size = 0x10000, scoped, tag = 'input window, operand 5, single buffered']
    #allocation6 [shape = 's32[1]{0}', space=sflag, size = 0x4, scoped, tag = 'scoped memory for tpu_custom_call.1']
    #allocation7 [shape = 'u8[16384]{0}', space=vmem, size = 0x4000, scoped, tag = 'output window, operand 0, single buffered']
    %12 = vsyncpa [#allocation3], 0
    %13 = vsyncpa [#allocation6], 0
    %14 = vsyncpa [#allocation4], 0
    // Predicated region
    $region2: #{tpu_custom_call.1} parent=1 // pred_check
      _
    $region3: #{tpu_custom_call.1} parent=1 // pred_check_branch
      %16 = sbr.rel (0) target = $region5
    $region4: #{tpu_custom_call.1} parent=1 // pred_region
      _
    $region5: #{tpu_custom_call.1} parent=1 // pred_fallthru
      _
    // Predicated region
    $region6: #{tpu_custom_call.1} parent=1 // pred_check
      _
    $region7: #{tpu_custom_call.1} parent=1 // pred_check_branch
      %18 = sbr.rel (0) target = $region9
    $region8: #{tpu_custom_call.1} parent=1 // pred_region
      _
    $region9: #{tpu_custom_call.1} parent=1 // pred_fallthru
      _
    // Predicated region
    $region10: #{tpu_custom_call.1} parent=1 // pred_check
      _
    $region11: #{tpu_custom_call.1} parent=1 // pred_check_branch
      %20 = sbr.rel (0) target = $region13
    $region12: #{tpu_custom_call.1} parent=1 // pred_region
      %s22 = ssub.s32 1024, 1024
      %23 = vsyncadd [#allocation3], %s22
      %s24 = sshll.u32 [#allocation2], 4
      %s25 = int_to_ptr.vmem [resolvable:$true] %s24
      %30 = dma.hbm_to_vmem [thread:$0]  %s2, 1024, %s25, [#allocation3], 64, 64, 4
    $region13: #{tpu_custom_call.1} parent=1 // pred_fallthru
      _
    // Predicated region
    $region14: #{tpu_custom_call.1} parent=1 // pred_check
      _
    $region15: #{tpu_custom_call.1} parent=1 // pred_check_branch
      %32 = sbr.rel (0) target = $region17
    $region16: #{tpu_custom_call.1} parent=1 // pred_region
      _
    $region17: #{tpu_custom_call.1} parent=1 // pred_fallthru
      _
    // Predicated region
    $region18: #{tpu_custom_call.1} parent=1 // pred_check
      _
    $region19: #{tpu_custom_call.1} parent=1 // pred_check_branch
      %34 = sbr.rel (0) target = $region21
    $region20: #{tpu_custom_call.1} parent=1 // pred_region
      _
    $region21: #{tpu_custom_call.1} parent=1 // pred_fallthru
      _
    // Predicated region
    $region22: #{tpu_custom_call.1} parent=1 // pred_check
      _
    $region23: #{tpu_custom_call.1} parent=1 // pred_check_branch
      %36 = sbr.rel (0) target = $region25
    $region24: #{tpu_custom_call.1} parent=1 // pred_region
      %s38 = ssub.s32 2048, 2048
      %39 = vsyncadd [#allocation6], %s38
      %s40 = sshll.u32 [#allocation5], 4
      %s41 = int_to_ptr.vmem [resolvable:$true] %s40
      %46 = dma.hbm_to_vmem [thread:$0]  %s5, 2048, %s41, [#allocation6], 64, 64, 4
    $region25: #{tpu_custom_call.1} parent=1 // pred_fallthru
      _
    // Predicated region
    $region26: #{tpu_custom_call.1} parent=1 // pred_check
      _
    $region27: #{tpu_custom_call.1} parent=1 // pred_check_branch
      %48 = sbr.rel (0) target = $region29
    $region28: #{tpu_custom_call.1} parent=1 // pred_region
      _
    $region29: #{tpu_custom_call.1} parent=1 // pred_fallthru
      _
    // Predicated region
    $region30: #{tpu_custom_call.1} parent=1 // pred_check
      _
    $region31: #{tpu_custom_call.1} parent=1 // pred_check_branch
      %50 = sbr.rel (0) target = $region33
    $region32: #{tpu_custom_call.1} parent=1 // pred_region
      %51 = dma.done [#allocation3], 1024
    $region33: #{tpu_custom_call.1} parent=1 // pred_fallthru
      _
    // Predicated region
    $region34: #{tpu_custom_call.1} parent=1 // pred_check
      _
    $region35: #{tpu_custom_call.1} parent=1 // pred_check_branch
      %53 = sbr.rel (0) target = $region37
    $region36: #{tpu_custom_call.1} parent=1 // pred_region
      %54 = dma.done [#allocation6], 2048
    $region37: #{tpu_custom_call.1} parent=1 // pred_fallthru
      _
    %v56 = vld [vmem:[%s0] sm:$0xff]
    %v57 = vld [vmem:[%s0 + $0x8] sm:$0xff]
    %v58 = vld [vmem:[%s0 + $0x10] sm:$0xff]
    %v59 = vld [vmem:[%s0 + $0x18] sm:$0xff]
    %v60 = vld [vmem:[%s0 + $0x20] sm:$0xff]
    %v61 = vld [vmem:[%s0 + $0x28] sm:$0xff]
    %v62 = vld [vmem:[%s0 + $0x30] sm:$0xff]
    %v63 = vld [vmem:[%s0 + $0x38] sm:$0xff]
    %v64 = vlaneseq
    %v65 = vand.u32 %v64, 127
    %66 = vset.pattern.permute.xlu0 0
    %67 = vperm.xlu0 %66, %v56
    %v68 = vpop.permute.xlu0 %67
    %69 = vset.pattern.permute.xlu0 0
    %70 = vperm.xlu0 %69, %v57
    %v71 = vpop.permute.xlu0 %70
    %72 = vset.pattern.permute.xlu0 0
    %73 = vperm.xlu0 %72, %v58
    %v74 = vpop.permute.xlu0 %73
    %75 = vset.pattern.permute.xlu0 0
    %76 = vperm.xlu0 %75, %v59
    %v77 = vpop.permute.xlu0 %76
    %78 = vset.pattern.permute.xlu0 0
    %79 = vperm.xlu0 %78, %v60
    %v80 = vpop.permute.xlu0 %79
    %81 = vset.pattern.permute.xlu0 0
    %82 = vperm.xlu0 %81, %v61
    %v83 = vpop.permute.xlu0 %82
    %84 = vset.pattern.permute.xlu0 0
    %85 = vperm.xlu0 %84, %v62
    %v86 = vpop.permute.xlu0 %85
    %87 = vset.pattern.permute.xlu0 0
    %88 = vperm.xlu0 %87, %v63
    %v89 = vpop.permute.xlu0 %88
    %vm90 = vcmp.eq.s32.totalorder %v68, %v65
    %vm91 = vcmp.eq.s32.totalorder %v71, %v65
    %vm92 = vcmp.eq.s32.totalorder %v74, %v65
    %vm93 = vcmp.eq.s32.totalorder %v77, %v65
    %vm94 = vcmp.eq.s32.totalorder %v80, %v65
    %vm95 = vcmp.eq.s32.totalorder %v83, %v65
    %vm96 = vcmp.eq.s32.totalorder %v86, %v65
    %vm97 = vcmp.eq.s32.totalorder %v89, %v65
    %v98 = vsel %vm90, 1, 0
    %v99 = vsel %vm91, 1, 0
    %v100 = vsel %vm92, 1, 0
    %v101 = vsel %vm93, 1, 0
    %v102 = vsel %vm94, 1, 0
    %v103 = vsel %vm95, 1, 0
    %v104 = vsel %vm96, 1, 0
    %v105 = vsel %vm97, 1, 0
    %v106 = vcvt.s32.f32 %v98
    %v107 = vcvt.s32.f32 %v99
    %v108 = vcvt.s32.f32 %v100
    %v109 = vcvt.s32.f32 %v101
    %v110 = vcvt.s32.f32 %v102
    %v111 = vcvt.s32.f32 %v103
    %v112 = vcvt.s32.f32 %v104
    %v113 = vcvt.s32.f32 %v105
    %v114 = vpack.c.bf16 %v107, %v106
    %v115 = vpack.c.bf16 %v109, %v108
    %v116 = vpack.c.bf16 %v111, %v110
    %v117 = vpack.c.bf16 %v113, %v112
    %v118 = vld [vmem:[#allocation2] sm:$0xf]
    %v119 = vld [vmem:[#allocation2 + $0x4] sm:$0xf]
    %v120 = vld [vmem:[#allocation2 + $0x8] sm:$0xf]
    %v121 = vld [vmem:[#allocation2 + $0xc] sm:$0xf]
    %v122 = vld [vmem:[#allocation2 + $0x10] sm:$0xf]
    %v123 = vld [vmem:[#allocation2 + $0x14] sm:$0xf]
    %v124 = vld [vmem:[#allocation2 + $0x18] sm:$0xf]
    %v125 = vld [vmem:[#allocation2 + $0x1c] sm:$0xf]
    %v126 = vld [vmem:[#allocation2 + $0x20] sm:$0xf]
    %v127 = vld [vmem:[#allocation2 + $0x24] sm:$0xf]
    %v128 = vld [vmem:[#allocation2 + $0x28] sm:$0xf]
    %v129 = vld [vmem:[#allocation2 + $0x2c] sm:$0xf]
    %v130 = vld [vmem:[#allocation2 + $0x30] sm:$0xf]
    %v131 = vld [vmem:[#allocation2 + $0x34] sm:$0xf]
    %v132 = vld [vmem:[#allocation2 + $0x38] sm:$0xf]
    %v133 = vld [vmem:[#allocation2 + $0x3c] sm:$0xf]
    %v150 = vunpack.c.l.b16 %v118
    %v151 = vunpack.c.l.b16 %v119
    %v152 = vunpack.c.l.b16 %v120
    %v153 = vunpack.c.l.b16 %v121
    %v154 = vunpack.c.l.b16 %v122
    %v155 = vunpack.c.l.b16 %v123
    %v156 = vunpack.c.l.b16 %v124
    %v157 = vunpack.c.l.b16 %v125
    %v158 = vunpack.c.l.b16 %v126
    %v159 = vunpack.c.l.b16 %v127
    %v160 = vunpack.c.l.b16 %v128
    %v161 = vunpack.c.l.b16 %v129
    %v162 = vunpack.c.l.b16 %v130
    %v163 = vunpack.c.l.b16 %v131
    %v164 = vunpack.c.l.b16 %v132
    %v165 = vunpack.c.l.b16 %v133
    %v166 = vpack.c.b16 %v151, %v150
    %v167 = vpack.c.b16 %v153, %v152
    %v168 = vpack.c.b16 %v155, %v154
    %v169 = vpack.c.b16 %v157, %v156
    %v170 = vpack.c.b16 %v159, %v158
    %v171 = vpack.c.b16 %v161, %v160
    %v172 = vpack.c.b16 %v163, %v162
    %v173 = vpack.c.b16 %v165, %v164
    %182 = vmatprep.subr.bf16.mxu0 0
    %183 = vmatpush1.bf16.msra.mxu0 %v166
    %184 = vmatprep.subr.bf16.mxu0 0
    %185 = vmatpush1.bf16.msra.mxu0 %v167
    %186 = vmatprep.subr.bf16.mxu0 0
    %187 = vmatpush1.bf16.msra.mxu0 %v168
    %188 = vmatprep.subr.bf16.mxu0 0
    %189 = vmatpush1.bf16.msra.mxu0 %v169
    %190 = vmatprep.subr.bf16.mxu0 0
    %191 = vmatpush1.bf16.msra.mxu0 %v170
    %192 = vmatprep.subr.bf16.mxu0 0
    %193 = vmatpush1.bf16.msra.mxu0 %v171
    %194 = vmatprep.subr.bf16.mxu0 0
    %195 = vmatpush1.bf16.msra.mxu0 %v172
    %196 = vmatprep.subr.bf16.mxu0 0
    %197 = vmatpush1.bf16.msra.mxu0 %v173
    %198 = vmatprep.subr.bf16.mxu0 0
    %199 = vmatpush1.bf16.msra.mxu0 0
    %200 = vmatprep.subr.bf16.mxu0 0
    %201 = vmatpush1.bf16.msra.mxu0 0
    %202 = vmatprep.subr.bf16.mxu0 0
    %203 = vmatpush1.bf16.msra.mxu0 0
    %204 = vmatprep.subr.bf16.mxu0 0
    %205 = vmatpush1.bf16.msra.mxu0 0
    %206 = vmatprep.subr.bf16.mxu0 0
    %207 = vmatpush1.bf16.msra.mxu0 0
    %208 = vmatprep.subr.bf16.mxu0 0
    %209 = vmatpush1.bf16.msra.mxu0 0
    %210 = vmatprep.subr.bf16.mxu0 0
    %211 = vmatpush1.bf16.msra.mxu0 0
    %212 = vmatprep.subr.bf16.mxu0 0
    %213 = vmatpush1.bf16.msra.mxu0 0
    %214 = vmatprep.mubr.bf16.mxu0 0
    %215 = vmatmul.mubr.bf16.gmra.mrb[0].mxu0 %v114
    %v216 = vpop.f32.mrb[0].mxu0
    %v217 = vadd.f32 0.0, %v216
    %v218 = vpop.f32.mrb[0].mxu0
    %v219 = vpop.f32.mrb[0].mxu0
    %v220 = vadd.f32 0.0, %v219
    %v221 = vpop.f32.mrb[0].mxu0
    %222 = vmatprep.mubr.bf16.mxu0 0
    %223 = vmatmul.mubr.bf16.gmra.mrb[0].mxu0 %v115
    %v224 = vpop.f32.mrb[0].mxu0
    %v225 = vadd.f32 0.0, %v224
    %v226 = vpop.f32.mrb[0].mxu0
    %v227 = vpop.f32.mrb[0].mxu0
    %v228 = vadd.f32 0.0, %v227
    %v229 = vpop.f32.mrb[0].mxu0
    %230 = vmatprep.mubr.bf16.mxu0 0
    %231 = vmatmul.mubr.bf16.gmra.mrb[0].mxu0 %v116
    %v232 = vpop.f32.mrb[0].mxu0
    %v233 = vadd.f32 0.0, %v232
    %v234 = vpop.f32.mrb[0].mxu0
    %v235 = vpop.f32.mrb[0].mxu0
    %v236 = vadd.f32 0.0, %v235
    %v237 = vpop.f32.mrb[0].mxu0
    %238 = vmatprep.mubr.bf16.mxu0 0
    %239 = vmatmul.mubr.bf16.gmra.mrb[0].mxu0 %v117
    %v240 = vpop.f32.mrb[0].mxu0
    %v241 = vadd.f32 0.0, %v240
    %v242 = vpop.f32.mrb[0].mxu0
    %v243 = vpop.f32.mrb[0].mxu0
    %v244 = vadd.f32 0.0, %v243
    %v245 = vpop.f32.mrb[0].mxu0
    %246 = vdwg.mxu0
    %v247 = vpack.c.bf16 %v220, %v217
    %v248 = vpack.c.bf16 %v228, %v225
    %v249 = vpack.c.bf16 %v236, %v233
    %v250 = vpack.c.bf16 %v244, %v241
    %v251 = vld [vmem:[%s3] sm:$0xff]
    %v252 = vld [vmem:[%s3 + $0x8] sm:$0xff]
    %v253 = vld [vmem:[%s3 + $0x10] sm:$0xff]
    %v254 = vld [vmem:[%s3 + $0x18] sm:$0xff]
    %v255 = vld [vmem:[%s3 + $0x20] sm:$0xff]
    %v256 = vld [vmem:[%s3 + $0x28] sm:$0xff]
    %v257 = vld [vmem:[%s3 + $0x30] sm:$0xff]
    %v258 = vld [vmem:[%s3 + $0x38] sm:$0xff]
    %v259 = vld [vmem:[%s3 + $0x40] sm:$0xff]
    %v260 = vld [vmem:[%s3 + $0x48] sm:$0xff]
    %v261 = vld [vmem:[%s3 + $0x50] sm:$0xff]
    %v262 = vld [vmem:[%s3 + $0x58] sm:$0xff]
    %v263 = vld [vmem:[%s3 + $0x60] sm:$0xff]
    %v264 = vld [vmem:[%s3 + $0x68] sm:$0xff]
    %v265 = vld [vmem:[%s3 + $0x70] sm:$0xff]
    %v266 = vld [vmem:[%s3 + $0x78] sm:$0xff]
    %v267 = vld [vmem:[%s4] sm:$0x3]
    %v269 = vlaneseq
    %v270 = vshrl.u32 %v269, 7
    %v271 = vsub.s32 0, %v270
    %v272 = vrot.slane %v267, %v271
    %v273 = vlaneseq
    %v274 = vshrl.u32 %v273, 7
    %v275 = vsub.s32 1, %v274
    %v276 = vrot.slane %v267, %v275
    %v295 = vunpack.c.l.b16 %v251
    %v296 = vunpack.c.h.b16 %v251
    %v297 = vunpack.c.l.b16 %v252
    %v298 = vunpack.c.h.b16 %v252
    %v299 = vunpack.c.l.b16 %v253
    %v300 = vunpack.c.h.b16 %v253
    %v301 = vunpack.c.l.b16 %v254
    %v302 = vunpack.c.h.b16 %v254
    %v303 = vunpack.c.l.b16 %v255
    %v304 = vunpack.c.h.b16 %v255
    %v305 = vunpack.c.l.b16 %v256
    %v306 = vunpack.c.h.b16 %v256
    %v307 = vunpack.c.l.b16 %v257
    %v308 = vunpack.c.h.b16 %v257
    %v309 = vunpack.c.l.b16 %v258
    %v310 = vunpack.c.h.b16 %v258
    %v311 = vunpack.c.l.b16 %v259
    %v312 = vunpack.c.h.b16 %v259
    %v313 = vunpack.c.l.b16 %v260
    %v314 = vunpack.c.h.b16 %v260
    %v315 = vunpack.c.l.b16 %v261
    %v316 = vunpack.c.h.b16 %v261
    %v317 = vunpack.c.l.b16 %v262
    %v318 = vunpack.c.h.b16 %v262
    %v319 = vunpack.c.l.b16 %v263
    %v320 = vunpack.c.h.b16 %v263
    %v321 = vunpack.c.l.b16 %v264
    %v322 = vunpack.c.h.b16 %v264
    %v323 = vunpack.c.l.b16 %v265
    %v324 = vunpack.c.h.b16 %v265
    %v325 = vunpack.c.l.b16 %v266
    %v326 = vunpack.c.h.b16 %v266
    %v327 = vpack.c.b16 %v297, %v295
    %v328 = vpack.c.b16 %v298, %v296
    %v329 = vpack.c.b16 %v301, %v299
    %v330 = vpack.c.b16 %v302, %v300
    %v331 = vpack.c.b16 %v305, %v303
    %v332 = vpack.c.b16 %v306, %v304
    %v333 = vpack.c.b16 %v309, %v307
    %v334 = vpack.c.b16 %v310, %v308
    %v335 = vpack.c.b16 %v313, %v311
    %v336 = vpack.c.b16 %v314, %v312
    %v337 = vpack.c.b16 %v317, %v315
    %v338 = vpack.c.b16 %v318, %v316
    %v339 = vpack.c.b16 %v321, %v319
    %v340 = vpack.c.b16 %v322, %v320
    %v341 = vpack.c.b16 %v325, %v323
    %v342 = vpack.c.b16 %v326, %v324
    %359 = vmatprep.subr.bf16.mxu0 %v328
    %360 = vmatpush1.bf16.msra.mxu0 %v327
    %361 = vmatprep.subr.bf16.mxu0 %v330
    %362 = vmatpush1.bf16.msra.mxu0 %v329
    %363 = vmatprep.subr.bf16.mxu0 %v332
    %364 = vmatpush1.bf16.msra.mxu0 %v331
    %365 = vmatprep.subr.bf16.mxu0 %v334
    %366 = vmatpush1.bf16.msra.mxu0 %v333
    %367 = vmatprep.subr.bf16.mxu0 %v336
    %368 = vmatpush1.bf16.msra.mxu0 %v335
    %369 = vmatprep.subr.bf16.mxu0 %v338
    %370 = vmatpush1.bf16.msra.mxu0 %v337
    %371 = vmatprep.subr.bf16.mxu0 %v340
    %372 = vmatpush1.bf16.msra.mxu0 %v339
    %373 = vmatprep.subr.bf16.mxu0 %v342
    %374 = vmatpush1.bf16.msra.mxu0 %v341
    %375 = vmatprep.subr.bf16.mxu0 0
    %376 = vmatpush1.bf16.msra.mxu0 0
    %377 = vmatprep.subr.bf16.mxu0 0
    %378 = vmatpush1.bf16.msra.mxu0 0
    %379 = vmatprep.subr.bf16.mxu0 0
    %380 = vmatpush1.bf16.msra.mxu0 0
    %381 = vmatprep.subr.bf16.mxu0 0
    %382 = vmatpush1.bf16.msra.mxu0 0
    %383 = vmatprep.subr.bf16.mxu0 0
    %384 = vmatpush1.bf16.msra.mxu0 0
    %385 = vmatprep.subr.bf16.mxu0 0
    %386 = vmatpush1.bf16.msra.mxu0 0
    %387 = vmatprep.subr.bf16.mxu0 0
    %388 = vmatpush1.bf16.msra.mxu0 0
    %389 = vmatprep.subr.bf16.mxu0 0
    %390 = vmatpush1.bf16.msra.mxu0 0
    %391 = vmatprep.mubr.bf16.mxu0 0
    %392 = vmatmul.mubr.bf16.gmra.mrb[0].mxu0 %v247
    %v393 = vpop.f32.mrb[0].mxu0
    %v394 = vadd.f32 %v272, %v393
    %v395 = vpop.f32.mrb[0].mxu0
    %v396 = vadd.f32 %v276, %v395
    %v397 = vpop.f32.mrb[0].mxu0
    %v398 = vadd.f32 %v272, %v397
    %v399 = vpop.f32.mrb[0].mxu0
    %v400 = vadd.f32 %v276, %v399
    %401 = vmatprep.mubr.bf16.mxu0 0
    %402 = vmatmul.mubr.bf16.gmra.mrb[0].mxu0 %v248
    %v403 = vpop.f32.mrb[0].mxu0
    %v404 = vadd.f32 %v272, %v403
    %v405 = vpop.f32.mrb[0].mxu0
    %v406 = vadd.f32 %v276, %v405
    %v407 = vpop.f32.mrb[0].mxu0
    %v408 = vadd.f32 %v272, %v407
    %v409 = vpop.f32.mrb[0].mxu0
    %v410 = vadd.f32 %v276, %v409
    %411 = vmatprep.mubr.bf16.mxu0 0
    %412 = vmatmul.mubr.bf16.gmra.mrb[0].mxu0 %v249
    %v413 = vpop.f32.mrb[0].mxu0
    %v414 = vadd.f32 %v272, %v413
    %v415 = vpop.f32.mrb[0].mxu0
    %v416 = vadd.f32 %v276, %v415
    %v417 = vpop.f32.mrb[0].mxu0
    %v418 = vadd.f32 %v272, %v417
    %v419 = vpop.f32.mrb[0].mxu0
    %v420 = vadd.f32 %v276, %v419
    %421 = vmatprep.mubr.bf16.mxu0 0
    %422 = vmatmul.mubr.bf16.gmra.mrb[0].mxu0 %v250
    %v423 = vpop.f32.mrb[0].mxu0
    %v424 = vadd.f32 %v272, %v423
    %v425 = vpop.f32.mrb[0].mxu0
    %v426 = vadd.f32 %v276, %v425
    %v427 = vpop.f32.mrb[0].mxu0
    %v428 = vadd.f32 %v272, %v427
    %v429 = vpop.f32.mrb[0].mxu0
    %v430 = vadd.f32 %v276, %v429
    %431 = vdwg.mxu0
    %v432 = vmax.f32 %v394, 0.0
    %v433 = vmax.f32 %v396, 0.0
    %v434 = vmax.f32 %v398, 0.0
    %v435 = vmax.f32 %v400, 0.0
    %v436 = vmax.f32 %v404, 0.0
    %v437 = vmax.f32 %v406, 0.0
    %v438 = vmax.f32 %v408, 0.0
    %v439 = vmax.f32 %v410, 0.0
    %v440 = vmax.f32 %v414, 0.0
    %v441 = vmax.f32 %v416, 0.0
    %v442 = vmax.f32 %v418, 0.0
    %v443 = vmax.f32 %v420, 0.0
    %v444 = vmax.f32 %v424, 0.0
    %v445 = vmax.f32 %v426, 0.0
    %v446 = vmax.f32 %v428, 0.0
    %v447 = vmax.f32 %v430, 0.0
    %v448 = vpack.c.bf16 %v434, %v432
    %v449 = vpack.c.bf16 %v435, %v433
    %v450 = vpack.c.bf16 %v438, %v436
    %v451 = vpack.c.bf16 %v439, %v437
    %v452 = vpack.c.bf16 %v442, %v440
    %v453 = vpack.c.bf16 %v443, %v441
    %v454 = vpack.c.bf16 %v446, %v444
    %v455 = vpack.c.bf16 %v447, %v445
    %v456 = vld [vmem:[#allocation5] sm:$0xf]
    %v457 = vld [vmem:[#allocation5 + $0x4] sm:$0xf]
    %v458 = vld [vmem:[#allocation5 + $0x8] sm:$0xf]
    %v459 = vld [vmem:[#allocation5 + $0xc] sm:$0xf]
    %v460 = vld [vmem:[#allocation5 + $0x10] sm:$0xf]
    %v461 = vld [vmem:[#allocation5 + $0x14] sm:$0xf]
    %v462 = vld [vmem:[#allocation5 + $0x18] sm:$0xf]
    %v463 = vld [vmem:[#allocation5 + $0x1c] sm:$0xf]
    %v464 = vld [vmem:[#allocation5 + $0x20] sm:$0xf]
    %v465 = vld [vmem:[#allocation5 + $0x24] sm:$0xf]
    %v466 = vld [vmem:[#allocation5 + $0x28] sm:$0xf]
    %v467 = vld [vmem:[#allocation5 + $0x2c] sm:$0xf]
    %v468 = vld [vmem:[#allocation5 + $0x30] sm:$0xf]
    %v469 = vld [vmem:[#allocation5 + $0x34] sm:$0xf]
    %v470 = vld [vmem:[#allocation5 + $0x38] sm:$0xf]
    %v471 = vld [vmem:[#allocation5 + $0x3c] sm:$0xf]
    %v472 = vld [vmem:[#allocation5 + $0x40] sm:$0xf]
    %v473 = vld [vmem:[#allocation5 + $0x44] sm:$0xf]
    %v474 = vld [vmem:[#allocation5 + $0x48] sm:$0xf]
    %v475 = vld [vmem:[#allocation5 + $0x4c] sm:$0xf]
    %v476 = vld [vmem:[#allocation5 + $0x50] sm:$0xf]
    %v477 = vld [vmem:[#allocation5 + $0x54] sm:$0xf]
    %v478 = vld [vmem:[#allocation5 + $0x58] sm:$0xf]
    %v479 = vld [vmem:[#allocation5 + $0x5c] sm:$0xf]
    %v480 = vld [vmem:[#allocation5 + $0x60] sm:$0xf]
    %v481 = vld [vmem:[#allocation5 + $0x64] sm:$0xf]
    %v482 = vld [vmem:[#allocation5 + $0x68] sm:$0xf]
    %v483 = vld [vmem:[#allocation5 + $0x6c] sm:$0xf]
    %v484 = vld [vmem:[#allocation5 + $0x70] sm:$0xf]
    %v485 = vld [vmem:[#allocation5 + $0x74] sm:$0xf]
    %v486 = vld [vmem:[#allocation5 + $0x78] sm:$0xf]
    %v487 = vld [vmem:[#allocation5 + $0x7c] sm:$0xf]
    %v488 = vld [vmem:[%s6] sm:$0x1]
    %v490 = vlaneseq
    %v491 = vshrl.u32 %v490, 7
    %v492 = vsub.s32 0, %v491
    %v493 = vrot.slane %v488, %v492
    %v527 = vunpack.c.l.b16 %v456
    %v528 = vunpack.c.l.b16 %v457
    %v529 = vunpack.c.l.b16 %v458
    %v530 = vunpack.c.l.b16 %v459
    %v531 = vunpack.c.l.b16 %v460
    %v532 = vunpack.c.l.b16 %v461
    %v533 = vunpack.c.l.b16 %v462
    %v534 = vunpack.c.l.b16 %v463
    %v535 = vunpack.c.l.b16 %v464
    %v536 = vunpack.c.l.b16 %v465
    %v537 = vunpack.c.l.b16 %v466
    %v538 = vunpack.c.l.b16 %v467
    %v539 = vunpack.c.l.b16 %v468
    %v540 = vunpack.c.l.b16 %v469
    %v541 = vunpack.c.l.b16 %v470
    %v542 = vunpack.c.l.b16 %v471
    %v543 = vunpack.c.l.b16 %v472
    %v544 = vunpack.c.l.b16 %v473
    %v545 = vunpack.c.l.b16 %v474
    %v546 = vunpack.c.l.b16 %v475
    %v547 = vunpack.c.l.b16 %v476
    %v548 = vunpack.c.l.b16 %v477
    %v549 = vunpack.c.l.b16 %v478
    %v550 = vunpack.c.l.b16 %v479
    %v551 = vunpack.c.l.b16 %v480
    %v552 = vunpack.c.l.b16 %v481
    %v553 = vunpack.c.l.b16 %v482
    %v554 = vunpack.c.l.b16 %v483
    %v555 = vunpack.c.l.b16 %v484
    %v556 = vunpack.c.l.b16 %v485
    %v557 = vunpack.c.l.b16 %v486
    %v558 = vunpack.c.l.b16 %v487
    %v559 = vpack.c.b16 %v528, %v527
    %v560 = vpack.c.b16 %v530, %v529
    %v561 = vpack.c.b16 %v532, %v531
    %v562 = vpack.c.b16 %v534, %v533
    %v563 = vpack.c.b16 %v536, %v535
    %v564 = vpack.c.b16 %v538, %v537
    %v565 = vpack.c.b16 %v540, %v539
    %v566 = vpack.c.b16 %v542, %v541
    %v567 = vpack.c.b16 %v544, %v543
    %v568 = vpack.c.b16 %v546, %v545
    %v569 = vpack.c.b16 %v548, %v547
    %v570 = vpack.c.b16 %v550, %v549
    %v571 = vpack.c.b16 %v552, %v551
    %v572 = vpack.c.b16 %v554, %v553
    %v573 = vpack.c.b16 %v556, %v555
    %v574 = vpack.c.b16 %v558, %v557
    %591 = vmatprep.subr.bf16.mxu0 0
    %592 = vmatpush1.bf16.msra.mxu0 %v559
    %593 = vmatprep.subr.bf16.mxu0 0
    %594 = vmatpush1.bf16.msra.mxu0 %v560
    %595 = vmatprep.subr.bf16.mxu0 0
    %596 = vmatpush1.bf16.msra.mxu0 %v561
    %597 = vmatprep.subr.bf16.mxu0 0
    %598 = vmatpush1.bf16.msra.mxu0 %v562
    %599 = vmatprep.subr.bf16.mxu0 0
    %600 = vmatpush1.bf16.msra.mxu0 %v563
    %601 = vmatprep.subr.bf16.mxu0 0
    %602 = vmatpush1.bf16.msra.mxu0 %v564
    %603 = vmatprep.subr.bf16.mxu0 0
    %604 = vmatpush1.bf16.msra.mxu0 %v565
    %605 = vmatprep.subr.bf16.mxu0 0
    %606 = vmatpush1.bf16.msra.mxu0 %v566
    %607 = vmatprep.subr.bf16.mxu0 0
    %608 = vmatpush1.bf16.msra.mxu0 %v567
    %609 = vmatprep.subr.bf16.mxu0 0
    %610 = vmatpush1.bf16.msra.mxu0 %v568
    %611 = vmatprep.subr.bf16.mxu0 0
    %612 = vmatpush1.bf16.msra.mxu0 %v569
    %613 = vmatprep.subr.bf16.mxu0 0
    %614 = vmatpush1.bf16.msra.mxu0 %v570
    %615 = vmatprep.subr.bf16.mxu0 0
    %616 = vmatpush1.bf16.msra.mxu0 %v571
    %617 = vmatprep.subr.bf16.mxu0 0
    %618 = vmatpush1.bf16.msra.mxu0 %v572
    %619 = vmatprep.subr.bf16.mxu0 0
    %620 = vmatpush1.bf16.msra.mxu0 %v573
    %621 = vmatprep.subr.bf16.mxu0 0
    %622 = vmatpush1.bf16.msra.mxu0 %v574
    %623 = vmatprep.mubr.bf16.mxu0 %v449
    %624 = vmatmul.mubr.bf16.gmra.mrb[0].mxu0 %v448
    %v625 = vpop.f32.mrb[0].mxu0
    %v626 = vadd.f32 %v493, %v625
    %v627 = vpop.f32.mrb[0].mxu0
    %v628 = vpop.f32.mrb[0].mxu0
    %v629 = vadd.f32 %v493, %v628
    %v630 = vpop.f32.mrb[0].mxu0
    %631 = vmatprep.mubr.bf16.mxu0 %v451
    %632 = vmatmul.mubr.bf16.gmra.mrb[0].mxu0 %v450
    %v633 = vpop.f32.mrb[0].mxu0
    %v634 = vadd.f32 %v493, %v633
    %v635 = vpop.f32.mrb[0].mxu0
    %v636 = vpop.f32.mrb[0].mxu0
    %v637 = vadd.f32 %v493, %v636
    %v638 = vpop.f32.mrb[0].mxu0
    %639 = vmatprep.mubr.bf16.mxu0 %v453
    %640 = vmatmul.mubr.bf16.gmra.mrb[0].mxu0 %v452
    %v641 = vpop.f32.mrb[0].mxu0
    %v642 = vadd.f32 %v493, %v641
    %v643 = vpop.f32.mrb[0].mxu0
    %v644 = vpop.f32.mrb[0].mxu0
    %v645 = vadd.f32 %v493, %v644
    %v646 = vpop.f32.mrb[0].mxu0
    %647 = vmatprep.mubr.bf16.mxu0 %v455
    %648 = vmatmul.mubr.bf16.gmra.mrb[0].mxu0 %v454
    %v649 = vpop.f32.mrb[0].mxu0
    %v650 = vadd.f32 %v493, %v649
    %v651 = vpop.f32.mrb[0].mxu0
    %v652 = vpop.f32.mrb[0].mxu0
    %v653 = vadd.f32 %v493, %v652
    %v654 = vpop.f32.mrb[0].mxu0
    %655 = vdwg.mxu0
    %v656 = vld [vmem:[%s1] sm:$0xff]
    %v657 = vld [vmem:[%s1 + $0x8] sm:$0xff]
    %v658 = vld [vmem:[%s1 + $0x10] sm:$0xff]
    %v659 = vld [vmem:[%s1 + $0x18] sm:$0xff]
    %v660 = vld [vmem:[%s1 + $0x20] sm:$0xff]
    %v661 = vld [vmem:[%s1 + $0x28] sm:$0xff]
    %v662 = vld [vmem:[%s1 + $0x30] sm:$0xff]
    %v663 = vld [vmem:[%s1 + $0x38] sm:$0xff]
    %665 = vset.pattern.permute.xlu0 0
    %666 = vperm.xlu0 %665, %v656
    %v667 = vpop.permute.xlu0 %666
    %670 = vset.pattern.permute.xlu0 0
    %671 = vperm.xlu0 %670, %v657
    %v672 = vpop.permute.xlu0 %671
    %675 = vset.pattern.permute.xlu0 0
    %676 = vperm.xlu0 %675, %v658
    %v677 = vpop.permute.xlu0 %676
    %680 = vset.pattern.permute.xlu0 0
    %681 = vperm.xlu0 %680, %v659
    %v682 = vpop.permute.xlu0 %681
    %685 = vset.pattern.permute.xlu0 0
    %686 = vperm.xlu0 %685, %v660
    %v687 = vpop.permute.xlu0 %686
    %690 = vset.pattern.permute.xlu0 0
    %691 = vperm.xlu0 %690, %v661
    %v692 = vpop.permute.xlu0 %691
    %695 = vset.pattern.permute.xlu0 0
    %696 = vperm.xlu0 %695, %v662
    %v697 = vpop.permute.xlu0 %696
    %700 = vset.pattern.permute.xlu0 0
    %701 = vperm.xlu0 %700, %v663
    %v702 = vpop.permute.xlu0 %701
    %v704 = vmul.f32 %v626, %v667
    %v705 = vmul.f32 %v629, %v672
    %v706 = vmul.f32 %v634, %v677
    %v707 = vmul.f32 %v637, %v682
    %v708 = vmul.f32 %v642, %v687
    %v709 = vmul.f32 %v645, %v692
    %v710 = vmul.f32 %v650, %v697
    %v711 = vmul.f32 %v653, %v702
    %v712 = vpack.c.bf16 %v705, %v704
    %v713 = vpack.c.bf16 %v707, %v706
    %v714 = vpack.c.bf16 %v709, %v708
    %v715 = vpack.c.bf16 %v711, %v710
    %v720 = vunpack.c.l.b16 %v712
    %v721 = vunpack.c.h.b16 %v712
    %v722 = vunpack.c.l.b16 %v713
    %v723 = vunpack.c.h.b16 %v713
    %v724 = vunpack.c.l.b16 %v714
    %v725 = vunpack.c.h.b16 %v714
    %v726 = vunpack.c.l.b16 %v715
    %v727 = vunpack.c.h.b16 %v715
    %v728 = vpack.c.b16 %v720, %v720
    %v729 = vpack.c.b16 %v721, %v721
    %v730 = vpack.c.b16 %v722, %v722
    %v731 = vpack.c.b16 %v723, %v723
    %v732 = vpack.c.b16 %v724, %v724
    %v733 = vpack.c.b16 %v725, %v725
    %v734 = vpack.c.b16 %v726, %v726
    %v735 = vpack.c.b16 %v727, %v727
    %744 = vst [vmem:[#allocation7] sm:$0xf] %v728
    %745 = vst [vmem:[#allocation7 + $0x4] sm:$0xf] %v729
    %746 = vst [vmem:[#allocation7 + $0x8] sm:$0xf] %v730
    %747 = vst [vmem:[#allocation7 + $0xc] sm:$0xf] %v731
    %748 = vst [vmem:[#allocation7 + $0x10] sm:$0xf] %v732
    %749 = vst [vmem:[#allocation7 + $0x14] sm:$0xf] %v733
    %750 = vst [vmem:[#allocation7 + $0x18] sm:$0xf] %v734
    %751 = vst [vmem:[#allocation7 + $0x1c] sm:$0xf] %v735
    // Predicated region
    $region38: #{tpu_custom_call.1} parent=1 // pred_check
      _
    $region39: #{tpu_custom_call.1} parent=1 // pred_check_branch
      %753 = sbr.rel (0) target = $region41
    $region40: #{tpu_custom_call.1} parent=1 // pred_region
      %s755 = ssub.s32 512, 512
      %756 = vsyncadd [#allocation4], %s755
      %s757 = sshll.u32 [#allocation7], 4
      %s758 = int_to_ptr.vmem [resolvable:$true] %s757
      %763 = dma.vmem_to_hbm [thread:$0]  %s758, 512, %s7, [#allocation4], 64, 64, 4
    $region41: #{tpu_custom_call.1} parent=1 // pred_fallthru
      _
    // Predicated region
    $region42: #{tpu_custom_call.1} parent=1 // pred_check
      _
    $region43: #{tpu_custom_call.1} parent=1 // pred_check_branch
      %765 = sbr.rel (0) target = $region45
    $region44: #{tpu_custom_call.1} parent=1 // pred_region
      %766 = dma.done [#allocation4], 512
    $region45: #{tpu_custom_call.1} parent=1 // pred_fallthru
      _
    %767 = vsyncpa [#allocation3], 1
    %768 = vsyncpa [#allocation6], 1
    %769 = vsyncpa [#allocation4], 1

</llo_original>
